<compile_context>
chip_gen: v6e
topology: v6e:2x2x1
jax: 0.10.0
libtpu: 0.0.40
codegen_flags: <defaults>
</compile_context>

<pallas_src>
import jax
import jax.numpy as jnp
from jax.experimental import pallas as pl
from jax.experimental.pallas import tpu as pltpu


def _spectral_gating_kernel(x_ref, fw_ref, cs_ref, wr_ref, wi_ref, mi_ref,
                            o_ref):
    f32 = jnp.float32
    C, H, W = x_ref.shape[1], x_ref.shape[2], x_ref.shape[3]
    Wp = wr_ref.shape[2]

    x = x_ref[0]                                           # (C, H, W)

    # ---- forward rDFT along W: one dot, [Re | Im] side by side in lanes ----
    xw = jnp.dot(x.reshape(C * H, W), fw_ref[...],
                 preferred_element_type=f32)               # (C*H, 2*Wp)
    xw3 = xw.reshape(C, H, 2 * Wp)

    # ---- forward DFT along H: channel-batched matmul with shared [Ch; Sh] ----
    cs = jnp.broadcast_to(cs_ref[...], (C, 2 * H, H))      # (C, 2H, H)
    t = jnp.einsum('ckh,chv->ckv', cs, xw3,
                   preferred_element_type=f32)             # (C, 2H, 2*Wp)
    pr = t[:, :H, :Wp] + t[:, H:, Wp:]                     # Re X
    pi = t[:, :H, Wp:] - t[:, H:, :Wp]                     # Im X

    # ---- per-channel complex gating (alpha/(H*W) pre-folded into wr/wi) ----
    wr = wr_ref[...]                                       # (C, H, Wp)
    wi = wi_ref[...]
    zr = pr * wr - pi * wi
    zi = pr * wi + pi * wr

    # ---- inverse DFT along H (same shared [Ch; Sh] factor) ----
    z = jnp.concatenate([zr, zi], axis=-1)                 # (C, H, 2*Wp)
    t2 = jnp.einsum('ckh,chv->ckv', cs, z,
                    preferred_element_type=f32)            # (C, 2H, 2*Wp)
    gr = t2[:, :H, :Wp] - t2[:, H:, Wp:]
    gi = t2[:, :H, Wp:] + t2[:, H:, :Wp]

    # ---- inverse rDFT along W (mirror/norm already folded): one dot ----
    g = jnp.concatenate([gr, gi], axis=-1).reshape(C * H, 2 * Wp)
    y = jnp.dot(g, mi_ref[...], preferred_element_type=f32)   # (C*H, W)
    o_ref[0] = y.reshape(C, H, W)


@jax.jit
def spectral_gating_forward(x, weight):
    """x: (B, C, H, W) real.  weight: (C, H, W//2+1, 2) == complex_weight."""
    B, C, H, W = x.shape
    Wh = W // 2 + 1
    assert weight.shape == (C, H, Wh, 2)
    Wp = W                        # zero-pad half-spectrum width to W (exact fold)
    f32 = jnp.float32
    x = x.astype(f32)

    # ---- shape-only DFT factors (constant-folded under jit) ----
    hh = jnp.arange(H, dtype=f32)
    ww = jnp.arange(W, dtype=f32)
    vv = jnp.arange(Wh, dtype=f32)
    tp = 2.0 * jnp.pi
    Ch = jnp.cos(tp * jnp.outer(hh, hh) / H)               # (H, H), symmetric
    Sh = jnp.sin(tp * jnp.outer(hh, hh) / H)
    pad_w = ((0, 0), (0, Wp - Wh))
    Cw = jnp.pad(jnp.cos(tp * jnp.outer(ww, vv) / W), pad_w)   # (W, Wp)
    Sw = jnp.pad(jnp.sin(tp * jnp.outer(ww, vv) / W), pad_w)

    FW = jnp.concatenate([Cw, -Sw], axis=1)                # (W, 2*Wp): x@FW=[Re|Im]
    CS = jnp.concatenate([Ch, Sh], axis=0)                 # (2H, H) shared H factor
    MI = jnp.concatenate([Cw.T, -Sw.T], axis=0)            # (2*Wp, W) inverse-W

    # Fold Hermitian-mirror weights (1 at DC/Nyquist, 2 elsewhere) and the
    # combined rfft2+irfft2 'ortho' norm 1/(H*W) into the gating weight; pad.
    vi = jnp.arange(Wh)
    nyq = W // 2 if W % 2 == 0 else -1
    scale = jnp.where((vi == 0) | (vi == nyq), 1.0, 2.0).astype(f32) / (H * W)
    pad_g = ((0, 0), (0, 0), (0, Wp - Wh))
    wr = jnp.pad(weight[..., 0].astype(f32) * scale, pad_g)   # (C, H, Wp)
    wi = jnp.pad(weight[..., 1].astype(f32) * scale, pad_g)

    flops = B * (2 * C * H * W * 2 * Wp                    # forward-W dot
                 + 2 * (2 * C * 2 * H * H * 2 * Wp)        # two batched H matmuls
                 + 2 * C * H * 2 * Wp * W                  # inverse-W dot
                 + 6 * C * H * Wp)                         # gating
    bytes_accessed = 4 * (2 * B * C * H * W + 2 * C * H * Wp
                          + W * 2 * Wp + 2 * H * H + 2 * Wp * W)

    out = pl.pallas_call(
        _spectral_gating_kernel,
        out_shape=jax.ShapeDtypeStruct((B, C, H, W), f32),
        grid_spec=pltpu.PrefetchScalarGridSpec(
            num_scalar_prefetch=0,
            grid=(B,),
            in_specs=[
                pl.BlockSpec((1, C, H, W), lambda b: (b, 0, 0, 0)),   # x (one batch)
                pl.BlockSpec((W, 2 * Wp), lambda b: (0, 0)),          # FW
                pl.BlockSpec((2 * H, H), lambda b: (0, 0)),           # [Ch; Sh]
                pl.BlockSpec((C, H, Wp), lambda b: (0, 0, 0)),        # gate real
                pl.BlockSpec((C, H, Wp), lambda b: (0, 0, 0)),        # gate imag
                pl.BlockSpec((2 * Wp, W), lambda b: (0, 0)),          # MI
            ],
            out_specs=pl.BlockSpec((1, C, H, W), lambda b: (b, 0, 0, 0)),
        ),
        compiler_params=pltpu.CompilerParams(
            dimension_semantics=("parallel",),
            vmem_limit_bytes=4 * 1024 * 1024),
        cost_estimate=pl.CostEstimate(flops=flops, transcendentals=0,
                                      bytes_accessed=bytes_accessed),
    )(x, FW, CS, wr, wi, MI)
    return out


if __name__ == "__main__":
    key = jax.random.PRNGKey(0)
    kx, kw = jax.random.split(key)

    # dim = C; the module requires W//2+1 == H//2+1 for broadcasting, so H == W.
    B, C, H, W = 2, 4, 16, 16
    Wh = W // 2 + 1

    x = jax.random.normal(kx, (B, C, H, W), dtype=jnp.float32)
    # complex_weight = randn(dim, h, w, 2) * 0.02 -- deterministic synthetic init.
    weight = jax.random.normal(kw, (C, H, Wh, 2), dtype=jnp.float32) * 0.02

    y = spectral_gating_forward(x, weight)
    y = jax.block_until_ready(y)

    # Pure-JAX reference mirroring the PyTorch forward semantics.
    Xf = jnp.fft.rfft2(x, axes=(2, 3), norm="ortho")
    wc = weight[..., 0] + 1j * weight[..., 1]
    y_ref = jnp.fft.irfft2(Xf * wc[None], s=(H, W), axes=(2, 3), norm="ortho")
    y_ref = y_ref.reshape(B, C, H, W)

    assert y.shape == (B, C, H, W) and y.dtype == jnp.float32
    max_err = float(jnp.max(jnp.abs(y - y_ref)))
    assert max_err < 1e-4, f"max abs error {max_err}"
    print("KERNEL_OK")
</pallas_src>

<mosaic_0001>
module attributes {stable_mosaic.version = 11 : i64} {
  func.func @_spectral_gating_kernel(%arg0: i32, %arg1: memref<1x4x16x16xf32, #tpu.memory_space<vmem>>, %arg2: memref<16x32xf32, #tpu.memory_space<vmem>>, %arg3: memref<32x16xf32, #tpu.memory_space<vmem>>, %arg4: memref<4x16x16xf32, #tpu.memory_space<vmem>>, %arg5: memref<4x16x16xf32, #tpu.memory_space<vmem>>, %arg6: memref<32x16xf32, #tpu.memory_space<vmem>>, %arg7: memref<1x4x16x16xf32, #tpu.memory_space<vmem>>) attributes {dimension_semantics = [#tpu.dimension_semantics<parallel>], iteration_bounds = array<i64: 2>, scalar_prefetch = 0 : i64, scratch_operands = 0 : i64, tpu.core_type = #tpu.core_type<tc>, window_params = [{transform_indices = @transform_0, window_bounds = array<i64: 1, 4, 16, 16>}, {pipeline_mode = #tpu.pipeline_mode<synchronous>, transform_indices = @transform_1, window_bounds = array<i64: 16, 32>}, {pipeline_mode = #tpu.pipeline_mode<synchronous>, transform_indices = @transform_2, window_bounds = array<i64: 32, 16>}, {pipeline_mode = #tpu.pipeline_mode<synchronous>, transform_indices = @transform_3, window_bounds = array<i64: 4, 16, 16>}, {pipeline_mode = #tpu.pipeline_mode<synchronous>, transform_indices = @transform_4, window_bounds = array<i64: 4, 16, 16>}, {pipeline_mode = #tpu.pipeline_mode<synchronous>, transform_indices = @transform_5, window_bounds = array<i64: 32, 16>}, {transform_indices = @transform_6, window_bounds = array<i64: 1, 4, 16, 16>}]} {
    %c0 = arith.constant 0 : index
    %c0_0 = arith.constant 0 : index
    %c0_1 = arith.constant 0 : index
    %c0_2 = arith.constant 0 : index
    %0 = vector.load %arg1[%c0, %c0_0, %c0_1, %c0_2] : memref<1x4x16x16xf32, #tpu.memory_space<vmem>>, vector<1x4x16x16xf32>
    %1 = vector.shape_cast %0 : vector<1x4x16x16xf32> to vector<4x16x16xf32>
    %2 = vector.shape_cast %1 : vector<4x16x16xf32> to vector<64x16xf32>
    %c0_3 = arith.constant 0 : index
    %c0_4 = arith.constant 0 : index
    %3 = vector.load %arg2[%c0_3, %c0_4] : memref<16x32xf32, #tpu.memory_space<vmem>>, vector<16x32xf32>
    %cst = arith.constant dense<0.000000e+00> : vector<64x32xf32>
    %4 = tpu.matmul %2, %3, %cst {dimension_numbers = #tpu.dot_dimension_numbers<[1], [0], [0], [1], [0, 0, 1, 1], [], []>} : vector<64x16xf32>, vector<16x32xf32>, vector<64x32xf32> -> vector<64x32xf32>
    %5 = vector.shape_cast %4 : vector<64x32xf32> to vector<4x16x32xf32>
    %c0_5 = arith.constant 0 : index
    %c0_6 = arith.constant 0 : index
    %6 = vector.load %arg3[%c0_5, %c0_6] : memref<32x16xf32, #tpu.memory_space<vmem>>, vector<32x16xf32>
    %7 = vector.shape_cast %6 : vector<32x16xf32> to vector<1x32x16xf32>
    %8 = vector.broadcast %7 : vector<1x32x16xf32> to vector<4x32x16xf32>
    "tpu.trace_start"() <{level = 10 : i32, message = "ckh,chv->ckv"}> : () -> ()
    %cst_7 = arith.constant dense<0.000000e+00> : vector<4x32x32xf32>
    %9 = tpu.matmul %8, %5, %cst_7 {dimension_numbers = #tpu.dot_dimension_numbers<[2], [1], [1], [2], [0, 0, 0, 1, 1, 2], [0], [0]>} : vector<4x32x16xf32>, vector<4x16x32xf32>, vector<4x32x32xf32> -> vector<4x32x32xf32>
    "tpu.trace_stop"() : () -> ()
    %10 = vector.extract_strided_slice %9 {offsets = [0, 0, 0], sizes = [4, 16, 16], strides = [1, 1, 1]} : vector<4x32x32xf32> to vector<4x16x16xf32>
    %11 = vector.extract_strided_slice %9 {offsets = [0, 16, 16], sizes = [4, 16, 16], strides = [1, 1, 1]} : vector<4x32x32xf32> to vector<4x16x16xf32>
    %12 = arith.addf %10, %11 : vector<4x16x16xf32>
    %13 = vector.extract_strided_slice %9 {offsets = [0, 0, 16], sizes = [4, 16, 16], strides = [1, 1, 1]} : vector<4x32x32xf32> to vector<4x16x16xf32>
    %14 = vector.extract_strided_slice %9 {offsets = [0, 16, 0], sizes = [4, 16, 16], strides = [1, 1, 1]} : vector<4x32x32xf32> to vector<4x16x16xf32>
    %15 = arith.subf %13, %14 : vector<4x16x16xf32>
    %c0_8 = arith.constant 0 : index
    %c0_9 = arith.constant 0 : index
    %c0_10 = arith.constant 0 : index
    %16 = vector.load %arg4[%c0_8, %c0_9, %c0_10] : memref<4x16x16xf32, #tpu.memory_space<vmem>>, vector<4x16x16xf32>
    %c0_11 = arith.constant 0 : index
    %c0_12 = arith.constant 0 : index
    %c0_13 = arith.constant 0 : index
    %17 = vector.load %arg5[%c0_11, %c0_12, %c0_13] : memref<4x16x16xf32, #tpu.memory_space<vmem>>, vector<4x16x16xf32>
    %18 = arith.mulf %12, %16 : vector<4x16x16xf32>
    %19 = arith.mulf %15, %17 : vector<4x16x16xf32>
    %20 = arith.subf %18, %19 : vector<4x16x16xf32>
    %21 = arith.mulf %12, %17 : vector<4x16x16xf32>
    %22 = arith.mulf %15, %16 : vector<4x16x16xf32>
    %23 = arith.addf %21, %22 : vector<4x16x16xf32>
    %24 = tpu.concatenate %20, %23 in 2 : vector<4x16x16xf32>, vector<4x16x16xf32> -> vector<4x16x32xf32>
    "tpu.trace_start"() <{level = 10 : i32, message = "ckh,chv->ckv"}> : () -> ()
    %cst_14 = arith.constant dense<0.000000e+00> : vector<4x32x32xf32>
    %25 = tpu.matmul %8, %24, %cst_14 {dimension_numbers = #tpu.dot_dimension_numbers<[2], [1], [1], [2], [0, 0, 0, 1, 1, 2], [0], [0]>} : vector<4x32x16xf32>, vector<4x16x32xf32>, vector<4x32x32xf32> -> vector<4x32x32xf32>
    "tpu.trace_stop"() : () -> ()
    %26 = vector.extract_strided_slice %25 {offsets = [0, 0, 0], sizes = [4, 16, 16], strides = [1, 1, 1]} : vector<4x32x32xf32> to vector<4x16x16xf32>
    %27 = vector.extract_strided_slice %25 {offsets = [0, 16, 16], sizes = [4, 16, 16], strides = [1, 1, 1]} : vector<4x32x32xf32> to vector<4x16x16xf32>
    %28 = arith.subf %26, %27 : vector<4x16x16xf32>
    %29 = vector.extract_strided_slice %25 {offsets = [0, 0, 16], sizes = [4, 16, 16], strides = [1, 1, 1]} : vector<4x32x32xf32> to vector<4x16x16xf32>
    %30 = vector.extract_strided_slice %25 {offsets = [0, 16, 0], sizes = [4, 16, 16], strides = [1, 1, 1]} : vector<4x32x32xf32> to vector<4x16x16xf32>
    %31 = arith.addf %29, %30 : vector<4x16x16xf32>
    %32 = tpu.concatenate %28, %31 in 2 : vector<4x16x16xf32>, vector<4x16x16xf32> -> vector<4x16x32xf32>
    %33 = vector.shape_cast %32 : vector<4x16x32xf32> to vector<64x32xf32>
    %c0_15 = arith.constant 0 : index
    %c0_16 = arith.constant 0 : index
    %34 = vector.load %arg6[%c0_15, %c0_16] : memref<32x16xf32, #tpu.memory_space<vmem>>, vector<32x16xf32>
    %cst_17 = arith.constant dense<0.000000e+00> : vector<64x16xf32>
    %35 = tpu.matmul %33, %34, %cst_17 {dimension_numbers = #tpu.dot_dimension_numbers<[1], [0], [0], [1], [0, 0, 1, 1], [], []>} : vector<64x32xf32>, vector<32x16xf32>, vector<64x16xf32> -> vector<64x16xf32>
    %36 = vector.shape_cast %35 : vector<64x16xf32> to vector<4x16x16xf32>
    %c0_18 = arith.constant 0 : index
    %c0_19 = arith.constant 0 : index
    %c0_20 = arith.constant 0 : index
    %c0_21 = arith.constant 0 : index
    %37 = vector.load %arg7[%c0_18, %c0_19, %c0_20, %c0_21] : memref<1x4x16x16xf32, #tpu.memory_space<vmem>>, vector<1x4x16x16xf32>
    %38 = vector.shape_cast %37 : vector<1x4x16x16xf32> to vector<4x16x16xf32>
    %39 = vector.shape_cast %36 : vector<4x16x16xf32> to vector<1x4x16x16xf32>
    tpu.vector_store %arg7[%c0_18, %c0_19, %c0_20, %c0_21], %39 {strides = array<i32>} : memref<1x4x16x16xf32, #tpu.memory_space<vmem>>, vector<1x4x16x16xf32>,
    return
  }
  func.func @transform_0(%arg0: i32) -> (i32, i32, i32, i32) {
    %c0_i32 = arith.constant 0 : i32
    %c0_i32_0 = arith.constant 0 : i32
    %c0_i32_1 = arith.constant 0 : i32
    %c0_i32_2 = arith.constant 0 : i32
    return %arg0, %c0_i32, %c0_i32_0, %c0_i32_1 : i32, i32, i32, i32
  }
  func.func @transform_1(%arg0: i32) -> (i32, i32) {
    %c0_i32 = arith.constant 0 : i32
    %c0_i32_0 = arith.constant 0 : i32
    %c0_i32_1 = arith.constant 0 : i32
    return %c0_i32, %c0_i32_0 : i32, i32
  }
  func.func @transform_2(%arg0: i32) -> (i32, i32) {
    %c0_i32 = arith.constant 0 : i32
    %c0_i32_0 = arith.constant 0 : i32
    %c0_i32_1 = arith.constant 0 : i32
    return %c0_i32, %c0_i32_0 : i32, i32
  }
  func.func @transform_3(%arg0: i32) -> (i32, i32, i32) {
    %c0_i32 = arith.constant 0 : i32
    %c0_i32_0 = arith.constant 0 : i32
    %c0_i32_1 = arith.constant 0 : i32
    %c0_i32_2 = arith.constant 0 : i32
    return %c0_i32, %c0_i32_0, %c0_i32_1 : i32, i32, i32
  }
  func.func @transform_4(%arg0: i32) -> (i32, i32, i32) {
    %c0_i32 = arith.constant 0 : i32
    %c0_i32_0 = arith.constant 0 : i32
    %c0_i32_1 = arith.constant 0 : i32
    %c0_i32_2 = arith.constant 0 : i32
    return %c0_i32, %c0_i32_0, %c0_i32_1 : i32, i32, i32
  }
  func.func @transform_5(%arg0: i32) -> (i32, i32) {
    %c0_i32 = arith.constant 0 : i32
    %c0_i32_0 = arith.constant 0 : i32
    %c0_i32_1 = arith.constant 0 : i32
    return %c0_i32, %c0_i32_0 : i32, i32
  }
  func.func @transform_6(%arg0: i32) -> (i32, i32, i32, i32) {
    %c0_i32 = arith.constant 0 : i32
    %c0_i32_0 = arith.constant 0 : i32
    %c0_i32_1 = arith.constant 0 : i32
    %c0_i32_2 = arith.constant 0 : i32
    return %arg0, %c0_i32, %c0_i32_0, %c0_i32_1 : i32, i32, i32, i32
  }
}

</mosaic_0001>

<llo_original>
// kernel: spectral_gating_forward.1
$region0: #{spectral_gating_forward.1}
  #allocation0 [shape = 'u32[]', space=smem, size = 0x4, offset = 0x4, fixed_abs, tag = 'smem constant byte address 0x4 - core index']
  #allocation1 [shape = 'u32[144,128]{1,0:T(1,128)}', space=vmem, size = 0x12000, scoped, tag = 'internal scratch']
  %s0 = inlined_call_operand.vmem [shape: f32[2,4,16,16], index: 0, kind: input, shape index: {}]
  %s1 = inlined_call_operand.vmem [shape: f32[16,32], index: 1, kind: input, shape index: {}]
  %s2 = inlined_call_operand.vmem [shape: f32[32,16], index: 2, kind: input, shape index: {}]
  %s3 = inlined_call_operand.vmem [shape: f32[4,16,16], index: 3, kind: input, shape index: {}]
  %s4 = inlined_call_operand.vmem [shape: f32[4,16,16], index: 4, kind: input, shape index: {}]
  %s5 = inlined_call_operand.vmem [shape: f32[32,16], index: 5, kind: input, shape index: {}]
  %s6 = inlined_call_operand.hbm [shape: f32[2,4,16,16], index: 6, kind: output, shape index: {}]
  %s7 = sld [smem:[#allocation0]]
  $region57: #{spectral_gating_forward.1} parent=0
    _
  %s9 = ssub.s32 1, %s7
  %s10 = scalar_select 0, %s9, %s7
  $region1: #{spectral_gating_forward.1} parent=0
    #allocation2 [shape = 'u8[65536]{0}', space=vmem, size = 0x10000, scoped, tag = 'output window, operand 0']
    #allocation3 [shape = 's32[2]{0}', space=sflag, size = 0x8, scoped, tag = 'scoped memory for spectral_gating_forward.1']
    %11 = vsyncpa [#allocation3], 0
    %s12 = scalar_lea.sflag [#allocation3], 1
    %13 = vsyncpa %s12, 0
    loop: start=0, step=1, limit=4
    $region2: #{spectral_gating_forward.1} parent=1 // loop_pre_header
      _
    $region3: #{spectral_gating_forward.1} parent=1 // loop_header
      %s15 = sphi 0, %s19
      %p16 = scmp.ge.s32.totalorder %s15, 4
      %s25 = sphi 0, %s27
      %s28 = sphi 0, %s25
      %s29 = sphi 0, %s28
      %s45 = sphi 0, %s29
      %s49 = sphi 0, %s49
      %s51 = sphi 0, %s49
      %s52 = sphi 0, %s51
      %s66 = sphi 0, %s52
      %s70 = sphi 0, %s70
      %s72 = sphi 0, %s70
      %s73 = sphi 0, %s72
      %s87 = sphi 0, %s73
      %s91 = sphi 0, %s91
      %s93 = sphi 0, %s91
      %s94 = sphi 0, %s93
      %s108 = sphi 0, %s94
      %s112 = sphi 0, %s112
      %s114 = sphi 0, %s112
      %s115 = sphi 0, %s114
      %s129 = sphi 0, %s115
      %s133 = sphi 0, %s133
      %s135 = sphi 0, %s133
      %s136 = sphi 0, %s135
      %s150 = sphi 0, %s136
      %s156 = sphi 0, %s158
      %s159 = sphi 0, %s156
      %s160 = sphi 0, %s159
      %s176 = sphi 0, %s160
    $region4: #{spectral_gating_forward.1} parent=1 // loop_header_branch
      %18 = sbr.rel (%p16) target = $region8
    $region5: #{spectral_gating_forward.1} parent=1 // loop_body
      %s20 = ssub.s32 %s15, 1
      %s21 = ssub.s32 %s15, 2
      %s22 = sadd.s32 %s15, 1
      %s23 = ssub.s32 %s15, %s22
      %p24 = scmp.eq.s32.totalorder %s23, 0
      %s26 = sadd.s32 %s25, 1
      %s27 = scalar_select %p24, %s25, %s26
      %p30 = pneg %p24
      %p31 = scmp.eq.s32.totalorder %s15, 1
      %p32 = por %p30, %p31
      %p33 = scmp.ne.s32.totalorder %s25, %s28
      %p34 = scmp.eq.s32.totalorder %s15, 0
      %p35 = por %p33, %p34
      %p36 = scmp.ne.s32.totalorder %s25, %s28
      %p37 = scmp.eq.s32.totalorder %s20, 1
      %p38 = por %p36, %p37
      %p39 = scmp.ne.s32.totalorder %s28, %s29
      %p40 = scmp.eq.s32.totalorder %s20, 0
      %p41 = por %p39, %p40
      %p42 = scmp.ne.s32.totalorder %s28, %s29
      %p43 = scmp.eq.s32.totalorder %s21, 1
      %p44 = por %p42, %p43
      %p46 = scmp.ne.s32.totalorder %s29, %s45
      %p47 = scmp.eq.s32.totalorder %s21, 0
      %p48 = por %p46, %p47
      %s50 = sadd.s32 %s49, 1
      %p53 = scmp.eq.s32.totalorder %s15, 1
      %p54 = scmp.ne.s32.totalorder %s49, %s51
      %p55 = scmp.eq.s32.totalorder %s15, 0
      %p56 = por %p54, %p55
      %p57 = scmp.ne.s32.totalorder %s49, %s51
      %p58 = scmp.eq.s32.totalorder %s20, 1
      %p59 = por %p57, %p58
      %p60 = scmp.ne.s32.totalorder %s51, %s52
      %p61 = scmp.eq.s32.totalorder %s20, 0
      %p62 = por %p60, %p61
      %p63 = scmp.ne.s32.totalorder %s51, %s52
      %p64 = scmp.eq.s32.totalorder %s21, 1
      %p65 = por %p63, %p64
      %p67 = scmp.ne.s32.totalorder %s52, %s66
      %p68 = scmp.eq.s32.totalorder %s21, 0
      %p69 = por %p67, %p68
      %s71 = sadd.s32 %s70, 1
      %p74 = scmp.eq.s32.totalorder %s15, 1
      %p75 = scmp.ne.s32.totalorder %s70, %s72
      %p76 = scmp.eq.s32.totalorder %s15, 0
      %p77 = por %p75, %p76
      %p78 = scmp.ne.s32.totalorder %s70, %s72
      %p79 = scmp.eq.s32.totalorder %s20, 1
      %p80 = por %p78, %p79
      %p81 = scmp.ne.s32.totalorder %s72, %s73
      %p82 = scmp.eq.s32.totalorder %s20, 0
      %p83 = por %p81, %p82
      %p84 = scmp.ne.s32.totalorder %s72, %s73
      %p85 = scmp.eq.s32.totalorder %s21, 1
      %p86 = por %p84, %p85
      %p88 = scmp.ne.s32.totalorder %s73, %s87
      %p89 = scmp.eq.s32.totalorder %s21, 0
      %p90 = por %p88, %p89
      %s92 = sadd.s32 %s91, 1
      %p95 = scmp.eq.s32.totalorder %s15, 1
      %p96 = scmp.ne.s32.totalorder %s91, %s93
      %p97 = scmp.eq.s32.totalorder %s15, 0
      %p98 = por %p96, %p97
      %p99 = scmp.ne.s32.totalorder %s91, %s93
      %p100 = scmp.eq.s32.totalorder %s20, 1
      %p101 = por %p99, %p100
      %p102 = scmp.ne.s32.totalorder %s93, %s94
      %p103 = scmp.eq.s32.totalorder %s20, 0
      %p104 = por %p102, %p103
      %p105 = scmp.ne.s32.totalorder %s93, %s94
      %p106 = scmp.eq.s32.totalorder %s21, 1
      %p107 = por %p105, %p106
      %p109 = scmp.ne.s32.totalorder %s94, %s108
      %p110 = scmp.eq.s32.totalorder %s21, 0
      %p111 = por %p109, %p110
      %s113 = sadd.s32 %s112, 1
      %p116 = scmp.eq.s32.totalorder %s15, 1
      %p117 = scmp.ne.s32.totalorder %s112, %s114
      %p118 = scmp.eq.s32.totalorder %s15, 0
      %p119 = por %p117, %p118
      %p120 = scmp.ne.s32.totalorder %s112, %s114
      %p121 = scmp.eq.s32.totalorder %s20, 1
      %p122 = por %p120, %p121
      %p123 = scmp.ne.s32.totalorder %s114, %s115
      %p124 = scmp.eq.s32.totalorder %s20, 0
      %p125 = por %p123, %p124
      %p126 = scmp.ne.s32.totalorder %s114, %s115
      %p127 = scmp.eq.s32.totalorder %s21, 1
      %p128 = por %p126, %p127
      %p130 = scmp.ne.s32.totalorder %s115, %s129
      %p131 = scmp.eq.s32.totalorder %s21, 0
      %p132 = por %p130, %p131
      %s134 = sadd.s32 %s133, 1
      %p137 = scmp.eq.s32.totalorder %s15, 1
      %p138 = scmp.ne.s32.totalorder %s133, %s135
      %p139 = scmp.eq.s32.totalorder %s15, 0
      %p140 = por %p138, %p139
      %p141 = scmp.ne.s32.totalorder %s133, %s135
      %p142 = scmp.eq.s32.totalorder %s20, 1
      %p143 = por %p141, %p142
      %p144 = scmp.ne.s32.totalorder %s135, %s136
      %p145 = scmp.eq.s32.totalorder %s20, 0
      %p146 = por %p144, %p145
      %p147 = scmp.ne.s32.totalorder %s135, %s136
      %p148 = scmp.eq.s32.totalorder %s21, 1
      %p149 = por %p147, %p148
      %p151 = scmp.ne.s32.totalorder %s136, %s150
      %p152 = scmp.eq.s32.totalorder %s21, 0
      %p153 = por %p151, %p152
      %s154 = ssub.s32 %s15, %s22
      %p155 = scmp.eq.s32.totalorder %s154, 0
      %s157 = sadd.s32 %s156, 1
      %s158 = scalar_select %p155, %s156, %s157
      %p161 = pneg %p155
      %p162 = scmp.eq.s32.totalorder %s15, 1
      %p163 = por %p161, %p162
      %p164 = scmp.ne.s32.totalorder %s156, %s159
      %p165 = scmp.eq.s32.totalorder %s15, 0
      %p166 = por %p164, %p165
      %p167 = scmp.ne.s32.totalorder %s156, %s159
      %p168 = scmp.eq.s32.totalorder %s20, 1
      %p169 = por %p167, %p168
      %p170 = scmp.ne.s32.totalorder %s159, %s160
      %p171 = scmp.eq.s32.totalorder %s20, 0
      %p172 = por %p170, %p171
      %p173 = scmp.ne.s32.totalorder %s159, %s160
      %p174 = scmp.eq.s32.totalorder %s21, 1
      %p175 = por %p173, %p174
      %p177 = scmp.ne.s32.totalorder %s160, %s176
      %p178 = scmp.eq.s32.totalorder %s21, 0
      %p179 = por %p177, %p178
      %p180 = scmp.le.s32.totalorder 1, %s15
      %p181 = scmp.lt.s32.totalorder %s15, 3
      %p182 = pnand %p180, %p181
      %p183 = pneg %p182
      // Predicated region
      $region9: #{spectral_gating_forward.1} parent=5 // pred_check
        _
      $region10: #{spectral_gating_forward.1} parent=5 // pred_check_branch
        %185 = sbr.rel (%p182) target = $region12
      $region11: #{spectral_gating_forward.1} parent=5 // pred_region
        %s186 = ssub.s32 %s15, 1
        // Predicated region
        $region13: #{spectral_gating_forward.1} parent=11 // pred_check
          %p187 = pneg %p62
        $region14: #{spectral_gating_forward.1} parent=11 // pred_check_branch
          %189 = sbr.rel (%p187) target = $region16
        $region15: #{spectral_gating_forward.1} parent=11 // pred_region
          _
        $region16: #{spectral_gating_forward.1} parent=11 // pred_fallthru
          _
        // Predicated region
        $region17: #{spectral_gating_forward.1} parent=11 // pred_check
          %p190 = pneg %p83
        $region18: #{spectral_gating_forward.1} parent=11 // pred_check_branch
          %192 = sbr.rel (%p190) target = $region20
        $region19: #{spectral_gating_forward.1} parent=11 // pred_region
          _
        $region20: #{spectral_gating_forward.1} parent=11 // pred_fallthru
          _
        // Predicated region
        $region21: #{spectral_gating_forward.1} parent=11 // pred_check
          %p193 = pneg %p104
        $region22: #{spectral_gating_forward.1} parent=11 // pred_check_branch
          %195 = sbr.rel (%p193) target = $region24
        $region23: #{spectral_gating_forward.1} parent=11 // pred_region
          _
        $region24: #{spectral_gating_forward.1} parent=11 // pred_fallthru
          _
        // Predicated region
        $region25: #{spectral_gating_forward.1} parent=11 // pred_check
          %p196 = pneg %p125
        $region26: #{spectral_gating_forward.1} parent=11 // pred_check_branch
          %198 = sbr.rel (%p196) target = $region28
        $region27: #{spectral_gating_forward.1} parent=11 // pred_region
          _
        $region28: #{spectral_gating_forward.1} parent=11 // pred_fallthru
          _
        // Predicated region
        $region29: #{spectral_gating_forward.1} parent=11 // pred_check
          %p199 = pneg %p146
        $region30: #{spectral_gating_forward.1} parent=11 // pred_check_branch
          %201 = sbr.rel (%p199) target = $region32
        $region31: #{spectral_gating_forward.1} parent=11 // pred_region
          _
        $region32: #{spectral_gating_forward.1} parent=11 // pred_fallthru
          _
      $region12: #{spectral_gating_forward.1} parent=5 // pred_fallthru
        _
      %p202 = scmp.lt.s32.totalorder %s15, 2
      // Predicated region
      $region33: #{spectral_gating_forward.1} parent=5 // pred_check
        %p203 = pneg %p202
      $region34: #{spectral_gating_forward.1} parent=5 // pred_check_branch
        %205 = sbr.rel (%p203) target = $region36
      $region35: #{spectral_gating_forward.1} parent=5 // pred_region
        // Predicated region
        $region37: #{spectral_gating_forward.1} parent=35 // pred_check
          %p206 = pneg %p35
        $region38: #{spectral_gating_forward.1} parent=35 // pred_check_branch
          %208 = sbr.rel (%p206) target = $region40
        $region39: #{spectral_gating_forward.1} parent=35 // pred_region
          %p209 = scmp.lt.s32.totalorder %s15, 1
          %s210 = scalar_select %p209, %s15, 1
          %s211 = smul.addr %s210, 8
          %s212 = smul.addr %s211, 8
          %s213 = scalar_lea.vmem %s0, %s212
        $region40: #{spectral_gating_forward.1} parent=35 // pred_fallthru
          _
      $region36: #{spectral_gating_forward.1} parent=5 // pred_fallthru
        _
      %p214 = scmp.le.s32.totalorder 1, %s15
      %p215 = scmp.lt.s32.totalorder %s15, 3
      %p216 = pnand %p214, %p215
      %p217 = pneg %p216
      // Predicated region
      $region41: #{spectral_gating_forward.1} parent=5 // pred_check
        _
      $region42: #{spectral_gating_forward.1} parent=5 // pred_check_branch
        %219 = sbr.rel (%p216) target = $region44
      $region43: #{spectral_gating_forward.1} parent=5 // pred_region
        %s220 = ssub.s32 %s15, 1
        %p221 = scmp.lt.s32.totalorder %s20, 1
        %s222 = scalar_select %p221, %s20, 1
        %s223 = smul.addr %s222, 8
        %s224 = smul.addr %s223, 8
        %s225 = scalar_lea.vmem %s0, %s224
        %p226 = pneg %p41
        %p227 = pneg %p38
        %p228 = pneg %p62
        %p229 = pneg %p59
        %p230 = pneg %p83
        %p231 = pneg %p80
        %p232 = pneg %p104
        %p233 = pneg %p101
        %p234 = pneg %p125
        %p235 = pneg %p122
        %p236 = pneg %p146
        %p237 = pneg %p143
        %p238 = pneg %p172
        %p239 = pneg %p169
        %s240 = sand.u32 %s159, 1
        %s241 = scalar_lea.sflag [#allocation3], %s240
        %s242 = sand.u32 %s159, 1
        %s243 = smul.addr %s242, 64
        %s244 = scalar_lea.vmem [#allocation2], %s243
        %p245 = scmp.lt.s32.totalorder %s20, 1
        %s246 = scalar_select %p245, %s20, 1
        %s247 = smul.addr %s246, 8
        %s248 = smul.addr %s247, 8
        %s249 = scalar_lea.vmem %s0, %s248
        %v250 = vld [vmem:[%s249] sm:$0xff]
        %v251 = vld [vmem:[%s249 + $0x8] sm:$0xff]
        %v252 = vld [vmem:[%s249 + $0x10] sm:$0xff]
        %v253 = vld [vmem:[%s249 + $0x18] sm:$0xff]
        %v254 = vld [vmem:[%s249 + $0x20] sm:$0xff]
        %v255 = vld [vmem:[%s249 + $0x28] sm:$0xff]
        %v256 = vld [vmem:[%s249 + $0x30] sm:$0xff]
        %v257 = vld [vmem:[%s249 + $0x38] sm:$0xff]
        %v258 = vld [vmem:[%s1] sm:$0xff]
        %v259 = vld [vmem:[%s1 + $0x8] sm:$0xff]
        %vm260 = vcmask 130048
        %v262 = vsel %vm260, %v250, 0
        %v265 = vsel %vm260, %v251, 0
        %v268 = vsel %vm260, %v252, 0
        %v271 = vsel %vm260, %v253, 0
        %v274 = vsel %vm260, %v254, 0
        %v277 = vsel %vm260, %v255, 0
        %v280 = vsel %vm260, %v256, 0
        %v283 = vsel %vm260, %v257, 0
        %285 = vmatprep.subr.mxu0 0.0
        %286 = vmatpush1.msra.mxu0 0.0
        %287 = vmatprep.subr.mxu0 0.0
        %288 = vmatpush1.msra.mxu0 0.0
        %289 = vmatprep.subr.mxu0 0.0
        %290 = vmatpush1.msra.mxu0 0.0
        %291 = vmatprep.subr.mxu0 0.0
        %292 = vmatpush1.msra.mxu0 0.0
        %293 = vmatprep.subr.mxu0 0.0
        %294 = vmatpush1.msra.mxu0 0.0
        %295 = vmatprep.subr.mxu0 0.0
        %296 = vmatpush1.msra.mxu0 0.0
        %297 = vmatprep.subr.mxu0 0.0
        %298 = vmatpush1.msra.mxu0 0.0
        %299 = vmatprep.subr.mxu0 0.0
        %300 = vmatpush1.msra.mxu0 0.0
        %301 = vmatprep.subr.mxu0 0.0
        %302 = vmatpush1.msra.mxu0 0.0
        %303 = vmatprep.subr.mxu0 0.0
        %304 = vmatpush1.msra.mxu0 0.0
        %305 = vmatprep.subr.mxu0 0.0
        %306 = vmatpush1.msra.mxu0 0.0
        %307 = vmatprep.subr.mxu0 0.0
        %308 = vmatpush1.msra.mxu0 0.0
        %309 = vmatprep.subr.mxu0 0.0
        %310 = vmatpush1.msra.mxu0 0.0
        %311 = vmatprep.subr.mxu0 0.0
        %312 = vmatpush1.msra.mxu0 0.0
        %313 = vmatprep.subr.mxu0 0.0
        %314 = vmatpush1.msra.mxu0 %v259
        %315 = vmatprep.subr.mxu0 0.0
        %316 = vmatpush1.msra.mxu0 %v258
        %317 = vmatprep.subr.mxu0 0.0
        %318 = vmatpush2.msra.mxu0 0.0
        %319 = vmatprep.subr.mxu0 0.0
        %320 = vmatpush2.msra.mxu0 0.0
        %321 = vmatprep.subr.mxu0 0.0
        %322 = vmatpush2.msra.mxu0 0.0
        %323 = vmatprep.subr.mxu0 0.0
        %324 = vmatpush2.msra.mxu0 0.0
        %325 = vmatprep.subr.mxu0 0.0
        %326 = vmatpush2.msra.mxu0 0.0
        %327 = vmatprep.subr.mxu0 0.0
        %328 = vmatpush2.msra.mxu0 0.0
        %329 = vmatprep.subr.mxu0 0.0
        %330 = vmatpush2.msra.mxu0 0.0
        %331 = vmatprep.subr.mxu0 0.0
        %332 = vmatpush2.msra.mxu0 0.0
        %333 = vmatprep.subr.mxu0 0.0
        %334 = vmatpush2.msra.mxu0 0.0
        %335 = vmatprep.subr.mxu0 0.0
        %336 = vmatpush2.msra.mxu0 0.0
        %337 = vmatprep.subr.mxu0 0.0
        %338 = vmatpush2.msra.mxu0 0.0
        %339 = vmatprep.subr.mxu0 0.0
        %340 = vmatpush2.msra.mxu0 0.0
        %341 = vmatprep.subr.mxu0 0.0
        %342 = vmatpush2.msra.mxu0 0.0
        %343 = vmatprep.subr.mxu0 0.0
        %344 = vmatpush2.msra.mxu0 0.0
        %345 = vmatprep.subr.mxu0 0.0
        %346 = vmatpush2.msra.mxu0 0.0
        %347 = vmatprep.subr.mxu0 0.0
        %348 = vmatpush2.msra.mxu0 0.0
        %349 = vmatprep.mubr.f32.mxu0 0.0
        %350 = vmatmul.mubr.f32.gmra.mxu0 %v262
        %v351 = vpop.f32.mrf.mxu0
        %v352 = vadd.f32 0.0, %v351
        %v353 = vpop.f32.mrf.mxu0
        %354 = vmatprep.mubr.f32.mxu0 0.0
        %355 = vmatmul.mubr.f32.gmra.mxu0 %v265
        %v356 = vpop.f32.mrf.mxu0
        %v357 = vadd.f32 0.0, %v356
        %v358 = vpop.f32.mrf.mxu0
        %359 = vmatprep.mubr.f32.mxu0 0.0
        %360 = vmatmul.mubr.f32.gmra.mxu0 %v268
        %v361 = vpop.f32.mrf.mxu0
        %v362 = vadd.f32 0.0, %v361
        %v363 = vpop.f32.mrf.mxu0
        %364 = vmatprep.mubr.f32.mxu0 0.0
        %365 = vmatmul.mubr.f32.gmra.mxu0 %v271
        %v366 = vpop.f32.mrf.mxu0
        %v367 = vadd.f32 0.0, %v366
        %v368 = vpop.f32.mrf.mxu0
        %369 = vmatprep.mubr.f32.mxu0 0.0
        %370 = vmatmul.mubr.f32.gmra.mxu0 %v274
        %v371 = vpop.f32.mrf.mxu0
        %v372 = vadd.f32 0.0, %v371
        %v373 = vpop.f32.mrf.mxu0
        %374 = vmatprep.mubr.f32.mxu0 0.0
        %375 = vmatmul.mubr.f32.gmra.mxu0 %v277
        %v376 = vpop.f32.mrf.mxu0
        %v377 = vadd.f32 0.0, %v376
        %v378 = vpop.f32.mrf.mxu0
        %379 = vmatprep.mubr.f32.mxu0 0.0
        %380 = vmatmul.mubr.f32.gmra.mxu0 %v280
        %v381 = vpop.f32.mrf.mxu0
        %v382 = vadd.f32 0.0, %v381
        %v383 = vpop.f32.mrf.mxu0
        %384 = vmatprep.mubr.f32.mxu0 0.0
        %385 = vmatmul.mubr.f32.gmra.mxu0 %v283
        %v386 = vpop.f32.mrf.mxu0
        %v387 = vadd.f32 0.0, %v386
        %v388 = vpop.f32.mrf.mxu0
        %389 = vdwg.mxu0
        %v390 = vld [vmem:[%s2] sm:$0xff]
        %v391 = vld [vmem:[%s2 + $0x8] sm:$0xff]
        %v392 = vld [vmem:[%s2 + $0x10] sm:$0xff]
        %v393 = vld [vmem:[%s2 + $0x18] sm:$0xff]
        %v395 = vsel %vm260, %v390, 0
        %v398 = vsel %vm260, %v391, 0
        %v401 = vsel %vm260, %v392, 0
        %v404 = vsel %vm260, %v393, 0
        %406 = vmatprep.subr.mxu0 0.0
        %407 = vmatpush1.msra.mxu0 0.0
        %408 = vmatprep.subr.mxu0 0.0
        %409 = vmatpush1.msra.mxu0 0.0
        %410 = vmatprep.subr.mxu0 0.0
        %411 = vmatpush1.msra.mxu0 0.0
        %412 = vmatprep.subr.mxu0 0.0
        %413 = vmatpush1.msra.mxu0 0.0
        %414 = vmatprep.subr.mxu0 0.0
        %415 = vmatpush1.msra.mxu0 0.0
        %416 = vmatprep.subr.mxu0 0.0
        %417 = vmatpush1.msra.mxu0 0.0
        %418 = vmatprep.subr.mxu0 0.0
        %419 = vmatpush1.msra.mxu0 0.0
        %420 = vmatprep.subr.mxu0 0.0
        %421 = vmatpush1.msra.mxu0 0.0
        %422 = vmatprep.subr.mxu0 0.0
        %423 = vmatpush1.msra.mxu0 0.0
        %424 = vmatprep.subr.mxu0 0.0
        %425 = vmatpush1.msra.mxu0 0.0
        %426 = vmatprep.subr.mxu0 0.0
        %427 = vmatpush1.msra.mxu0 0.0
        %428 = vmatprep.subr.mxu0 0.0
        %429 = vmatpush1.msra.mxu0 0.0
        %430 = vmatprep.subr.mxu0 0.0
        %431 = vmatpush1.msra.mxu0 0.0
        %432 = vmatprep.subr.mxu0 0.0
        %433 = vmatpush1.msra.mxu0 0.0
        %434 = vmatprep.subr.mxu0 0.0
        %435 = vmatpush1.msra.mxu0 %v357
        %436 = vmatprep.subr.mxu0 0.0
        %437 = vmatpush1.msra.mxu0 %v352
        %438 = vmatprep.subr.mxu0 0.0
        %439 = vmatpush2.msra.mxu0 0.0
        %440 = vmatprep.subr.mxu0 0.0
        %441 = vmatpush2.msra.mxu0 0.0
        %442 = vmatprep.subr.mxu0 0.0
        %443 = vmatpush2.msra.mxu0 0.0
        %444 = vmatprep.subr.mxu0 0.0
        %445 = vmatpush2.msra.mxu0 0.0
        %446 = vmatprep.subr.mxu0 0.0
        %447 = vmatpush2.msra.mxu0 0.0
        %448 = vmatprep.subr.mxu0 0.0
        %449 = vmatpush2.msra.mxu0 0.0
        %450 = vmatprep.subr.mxu0 0.0
        %451 = vmatpush2.msra.mxu0 0.0
        %452 = vmatprep.subr.mxu0 0.0
        %453 = vmatpush2.msra.mxu0 0.0
        %454 = vmatprep.subr.mxu0 0.0
        %455 = vmatpush2.msra.mxu0 0.0
        %456 = vmatprep.subr.mxu0 0.0
        %457 = vmatpush2.msra.mxu0 0.0
        %458 = vmatprep.subr.mxu0 0.0
        %459 = vmatpush2.msra.mxu0 0.0
        %460 = vmatprep.subr.mxu0 0.0
        %461 = vmatpush2.msra.mxu0 0.0
        %462 = vmatprep.subr.mxu0 0.0
        %463 = vmatpush2.msra.mxu0 0.0
        %464 = vmatprep.subr.mxu0 0.0
        %465 = vmatpush2.msra.mxu0 0.0
        %466 = vmatprep.subr.mxu0 0.0
        %467 = vmatpush2.msra.mxu0 0.0
        %468 = vmatprep.subr.mxu0 0.0
        %469 = vmatpush2.msra.mxu0 0.0
        %470 = vmatprep.mubr.f32.mxu0 0.0
        %471 = vmatmul.mubr.f32.gmra.mxu0 %v395
        %v472 = vpop.f32.mrf.mxu0
        %v473 = vadd.f32 0.0, %v472
        %v474 = vpop.f32.mrf.mxu0
        %475 = vmatprep.mubr.f32.mxu0 0.0
        %476 = vmatmul.mubr.f32.gmra.mxu0 %v398
        %v477 = vpop.f32.mrf.mxu0
        %v478 = vadd.f32 0.0, %v477
        %v479 = vpop.f32.mrf.mxu0
        %480 = vmatprep.mubr.f32.mxu0 0.0
        %481 = vmatmul.mubr.f32.gmra.mxu0 %v401
        %v482 = vpop.f32.mrf.mxu0
        %v483 = vadd.f32 0.0, %v482
        %v484 = vpop.f32.mrf.mxu0
        %485 = vmatprep.mubr.f32.mxu0 0.0
        %486 = vmatmul.mubr.f32.gmra.mxu0 %v404
        %v487 = vpop.f32.mrf.mxu0
        %v488 = vadd.f32 0.0, %v487
        %v489 = vpop.f32.mrf.mxu0
        %490 = vdwg.mxu0
        %491 = vmatprep.subr.mxu0 0.0
        %492 = vmatpush1.msra.mxu0 0.0
        %493 = vmatprep.subr.mxu0 0.0
        %494 = vmatpush1.msra.mxu0 0.0
        %495 = vmatprep.subr.mxu0 0.0
        %496 = vmatpush1.msra.mxu0 0.0
        %497 = vmatprep.subr.mxu0 0.0
        %498 = vmatpush1.msra.mxu0 0.0
        %499 = vmatprep.subr.mxu0 0.0
        %500 = vmatpush1.msra.mxu0 0.0
        %501 = vmatprep.subr.mxu0 0.0
        %502 = vmatpush1.msra.mxu0 0.0
        %503 = vmatprep.subr.mxu0 0.0
        %504 = vmatpush1.msra.mxu0 0.0
        %505 = vmatprep.subr.mxu0 0.0
        %506 = vmatpush1.msra.mxu0 0.0
        %507 = vmatprep.subr.mxu0 0.0
        %508 = vmatpush1.msra.mxu0 0.0
        %509 = vmatprep.subr.mxu0 0.0
        %510 = vmatpush1.msra.mxu0 0.0
        %511 = vmatprep.subr.mxu0 0.0
        %512 = vmatpush1.msra.mxu0 0.0
        %513 = vmatprep.subr.mxu0 0.0
        %514 = vmatpush1.msra.mxu0 0.0
        %515 = vmatprep.subr.mxu0 0.0
        %516 = vmatpush1.msra.mxu0 0.0
        %517 = vmatprep.subr.mxu0 0.0
        %518 = vmatpush1.msra.mxu0 0.0
        %519 = vmatprep.subr.mxu0 0.0
        %520 = vmatpush1.msra.mxu0 %v367
        %521 = vmatprep.subr.mxu0 0.0
        %522 = vmatpush1.msra.mxu0 %v362
        %523 = vmatprep.subr.mxu0 0.0
        %524 = vmatpush2.msra.mxu0 0.0
        %525 = vmatprep.subr.mxu0 0.0
        %526 = vmatpush2.msra.mxu0 0.0
        %527 = vmatprep.subr.mxu0 0.0
        %528 = vmatpush2.msra.mxu0 0.0
        %529 = vmatprep.subr.mxu0 0.0
        %530 = vmatpush2.msra.mxu0 0.0
        %531 = vmatprep.subr.mxu0 0.0
        %532 = vmatpush2.msra.mxu0 0.0
        %533 = vmatprep.subr.mxu0 0.0
        %534 = vmatpush2.msra.mxu0 0.0
        %535 = vmatprep.subr.mxu0 0.0
        %536 = vmatpush2.msra.mxu0 0.0
        %537 = vmatprep.subr.mxu0 0.0
        %538 = vmatpush2.msra.mxu0 0.0
        %539 = vmatprep.subr.mxu0 0.0
        %540 = vmatpush2.msra.mxu0 0.0
        %541 = vmatprep.subr.mxu0 0.0
        %542 = vmatpush2.msra.mxu0 0.0
        %543 = vmatprep.subr.mxu0 0.0
        %544 = vmatpush2.msra.mxu0 0.0
        %545 = vmatprep.subr.mxu0 0.0
        %546 = vmatpush2.msra.mxu0 0.0
        %547 = vmatprep.subr.mxu0 0.0
        %548 = vmatpush2.msra.mxu0 0.0
        %549 = vmatprep.subr.mxu0 0.0
        %550 = vmatpush2.msra.mxu0 0.0
        %551 = vmatprep.subr.mxu0 0.0
        %552 = vmatpush2.msra.mxu0 0.0
        %553 = vmatprep.subr.mxu0 0.0
        %554 = vmatpush2.msra.mxu0 0.0
        %555 = vmatprep.mubr.f32.mxu0 0.0
        %556 = vmatmul.mubr.f32.gmra.mxu0 %v395
        %v557 = vpop.f32.mrf.mxu0
        %v558 = vadd.f32 0.0, %v557
        %v559 = vpop.f32.mrf.mxu0
        %560 = vmatprep.mubr.f32.mxu0 0.0
        %561 = vmatmul.mubr.f32.gmra.mxu0 %v398
        %v562 = vpop.f32.mrf.mxu0
        %v563 = vadd.f32 0.0, %v562
        %v564 = vpop.f32.mrf.mxu0
        %565 = vmatprep.mubr.f32.mxu0 0.0
        %566 = vmatmul.mubr.f32.gmra.mxu0 %v401
        %v567 = vpop.f32.mrf.mxu0
        %v568 = vadd.f32 0.0, %v567
        %v569 = vpop.f32.mrf.mxu0
        %570 = vmatprep.mubr.f32.mxu0 0.0
        %571 = vmatmul.mubr.f32.gmra.mxu0 %v404
        %v572 = vpop.f32.mrf.mxu0
        %v573 = vadd.f32 0.0, %v572
        %v574 = vpop.f32.mrf.mxu0
        %575 = vdwg.mxu0
        %576 = vmatprep.subr.mxu0 0.0
        %577 = vmatpush1.msra.mxu0 0.0
        %578 = vmatprep.subr.mxu0 0.0
        %579 = vmatpush1.msra.mxu0 0.0
        %580 = vmatprep.subr.mxu0 0.0
        %581 = vmatpush1.msra.mxu0 0.0
        %582 = vmatprep.subr.mxu0 0.0
        %583 = vmatpush1.msra.mxu0 0.0
        %584 = vmatprep.subr.mxu0 0.0
        %585 = vmatpush1.msra.mxu0 0.0
        %586 = vmatprep.subr.mxu0 0.0
        %587 = vmatpush1.msra.mxu0 0.0
        %588 = vmatprep.subr.mxu0 0.0
        %589 = vmatpush1.msra.mxu0 0.0
        %590 = vmatprep.subr.mxu0 0.0
        %591 = vmatpush1.msra.mxu0 0.0
        %592 = vmatprep.subr.mxu0 0.0
        %593 = vmatpush1.msra.mxu0 0.0
        %594 = vmatprep.subr.mxu0 0.0
        %595 = vmatpush1.msra.mxu0 0.0
        %596 = vmatprep.subr.mxu0 0.0
        %597 = vmatpush1.msra.mxu0 0.0
        %598 = vmatprep.subr.mxu0 0.0
        %599 = vmatpush1.msra.mxu0 0.0
        %600 = vmatprep.subr.mxu0 0.0
        %601 = vmatpush1.msra.mxu0 0.0
        %602 = vmatprep.subr.mxu0 0.0
        %603 = vmatpush1.msra.mxu0 0.0
        %604 = vmatprep.subr.mxu0 0.0
        %605 = vmatpush1.msra.mxu0 %v377
        %606 = vmatprep.subr.mxu0 0.0
        %607 = vmatpush1.msra.mxu0 %v372
        %608 = vmatprep.subr.mxu0 0.0
        %609 = vmatpush2.msra.mxu0 0.0
        %610 = vmatprep.subr.mxu0 0.0
        %611 = vmatpush2.msra.mxu0 0.0
        %612 = vmatprep.subr.mxu0 0.0
        %613 = vmatpush2.msra.mxu0 0.0
        %614 = vmatprep.subr.mxu0 0.0
        %615 = vmatpush2.msra.mxu0 0.0
        %616 = vmatprep.subr.mxu0 0.0
        %617 = vmatpush2.msra.mxu0 0.0
        %618 = vmatprep.subr.mxu0 0.0
        %619 = vmatpush2.msra.mxu0 0.0
        %620 = vmatprep.subr.mxu0 0.0
        %621 = vmatpush2.msra.mxu0 0.0
        %622 = vmatprep.subr.mxu0 0.0
        %623 = vmatpush2.msra.mxu0 0.0
        %624 = vmatprep.subr.mxu0 0.0
        %625 = vmatpush2.msra.mxu0 0.0
        %626 = vmatprep.subr.mxu0 0.0
        %627 = vmatpush2.msra.mxu0 0.0
        %628 = vmatprep.subr.mxu0 0.0
        %629 = vmatpush2.msra.mxu0 0.0
        %630 = vmatprep.subr.mxu0 0.0
        %631 = vmatpush2.msra.mxu0 0.0
        %632 = vmatprep.subr.mxu0 0.0
        %633 = vmatpush2.msra.mxu0 0.0
        %634 = vmatprep.subr.mxu0 0.0
        %635 = vmatpush2.msra.mxu0 0.0
        %636 = vmatprep.subr.mxu0 0.0
        %637 = vmatpush2.msra.mxu0 0.0
        %638 = vmatprep.subr.mxu0 0.0
        %639 = vmatpush2.msra.mxu0 0.0
        %640 = vmatprep.mubr.f32.mxu0 0.0
        %641 = vmatmul.mubr.f32.gmra.mxu0 %v395
        %v642 = vpop.f32.mrf.mxu0
        %v643 = vadd.f32 0.0, %v642
        %v644 = vpop.f32.mrf.mxu0
        %645 = vmatprep.mubr.f32.mxu0 0.0
        %646 = vmatmul.mubr.f32.gmra.mxu0 %v398
        %v647 = vpop.f32.mrf.mxu0
        %v648 = vadd.f32 0.0, %v647
        %v649 = vpop.f32.mrf.mxu0
        %650 = vmatprep.mubr.f32.mxu0 0.0
        %651 = vmatmul.mubr.f32.gmra.mxu0 %v401
        %v652 = vpop.f32.mrf.mxu0
        %v653 = vadd.f32 0.0, %v652
        %v654 = vpop.f32.mrf.mxu0
        %655 = vmatprep.mubr.f32.mxu0 0.0
        %656 = vmatmul.mubr.f32.gmra.mxu0 %v404
        %v657 = vpop.f32.mrf.mxu0
        %v658 = vadd.f32 0.0, %v657
        %v659 = vpop.f32.mrf.mxu0
        %660 = vdwg.mxu0
        %661 = vmatprep.subr.mxu0 0.0
        %662 = vmatpush1.msra.mxu0 0.0
        %663 = vmatprep.subr.mxu0 0.0
        %664 = vmatpush1.msra.mxu0 0.0
        %665 = vmatprep.subr.mxu0 0.0
        %666 = vmatpush1.msra.mxu0 0.0
        %667 = vmatprep.subr.mxu0 0.0
        %668 = vmatpush1.msra.mxu0 0.0
        %669 = vmatprep.subr.mxu0 0.0
        %670 = vmatpush1.msra.mxu0 0.0
        %671 = vmatprep.subr.mxu0 0.0
        %672 = vmatpush1.msra.mxu0 0.0
        %673 = vmatprep.subr.mxu0 0.0
        %674 = vmatpush1.msra.mxu0 0.0
        %675 = vmatprep.subr.mxu0 0.0
        %676 = vmatpush1.msra.mxu0 0.0
        %677 = vmatprep.subr.mxu0 0.0
        %678 = vmatpush1.msra.mxu0 0.0
        %679 = vmatprep.subr.mxu0 0.0
        %680 = vmatpush1.msra.mxu0 0.0
        %681 = vmatprep.subr.mxu0 0.0
        %682 = vmatpush1.msra.mxu0 0.0
        %683 = vmatprep.subr.mxu0 0.0
        %684 = vmatpush1.msra.mxu0 0.0
        %685 = vmatprep.subr.mxu0 0.0
        %686 = vmatpush1.msra.mxu0 0.0
        %687 = vmatprep.subr.mxu0 0.0
        %688 = vmatpush1.msra.mxu0 0.0
        %689 = vmatprep.subr.mxu0 0.0
        %690 = vmatpush1.msra.mxu0 %v387
        %691 = vmatprep.subr.mxu0 0.0
        %692 = vmatpush1.msra.mxu0 %v382
        %693 = vmatprep.subr.mxu0 0.0
        %694 = vmatpush2.msra.mxu0 0.0
        %695 = vmatprep.subr.mxu0 0.0
        %696 = vmatpush2.msra.mxu0 0.0
        %697 = vmatprep.subr.mxu0 0.0
        %698 = vmatpush2.msra.mxu0 0.0
        %699 = vmatprep.subr.mxu0 0.0
        %700 = vmatpush2.msra.mxu0 0.0
        %701 = vmatprep.subr.mxu0 0.0
        %702 = vmatpush2.msra.mxu0 0.0
        %703 = vmatprep.subr.mxu0 0.0
        %704 = vmatpush2.msra.mxu0 0.0
        %705 = vmatprep.subr.mxu0 0.0
        %706 = vmatpush2.msra.mxu0 0.0
        %707 = vmatprep.subr.mxu0 0.0
        %708 = vmatpush2.msra.mxu0 0.0
        %709 = vmatprep.subr.mxu0 0.0
        %710 = vmatpush2.msra.mxu0 0.0
        %711 = vmatprep.subr.mxu0 0.0
        %712 = vmatpush2.msra.mxu0 0.0
        %713 = vmatprep.subr.mxu0 0.0
        %714 = vmatpush2.msra.mxu0 0.0
        %715 = vmatprep.subr.mxu0 0.0
        %716 = vmatpush2.msra.mxu0 0.0
        %717 = vmatprep.subr.mxu0 0.0
        %718 = vmatpush2.msra.mxu0 0.0
        %719 = vmatprep.subr.mxu0 0.0
        %720 = vmatpush2.msra.mxu0 0.0
        %721 = vmatprep.subr.mxu0 0.0
        %722 = vmatpush2.msra.mxu0 0.0
        %723 = vmatprep.subr.mxu0 0.0
        %724 = vmatpush2.msra.mxu0 0.0
        %725 = vmatprep.mubr.f32.mxu0 0.0
        %726 = vmatmul.mubr.f32.gmra.mxu0 %v395
        %v727 = vpop.f32.mrf.mxu0
        %v728 = vadd.f32 0.0, %v727
        %v729 = vpop.f32.mrf.mxu0
        %730 = vmatprep.mubr.f32.mxu0 0.0
        %731 = vmatmul.mubr.f32.gmra.mxu0 %v398
        %v732 = vpop.f32.mrf.mxu0
        %v733 = vadd.f32 0.0, %v732
        %v734 = vpop.f32.mrf.mxu0
        %735 = vmatprep.mubr.f32.mxu0 0.0
        %736 = vmatmul.mubr.f32.gmra.mxu0 %v401
        %v737 = vpop.f32.mrf.mxu0
        %v738 = vadd.f32 0.0, %v737
        %v739 = vpop.f32.mrf.mxu0
        %740 = vmatprep.mubr.f32.mxu0 0.0
        %741 = vmatmul.mubr.f32.gmra.mxu0 %v404
        %v742 = vpop.f32.mrf.mxu0
        %v743 = vadd.f32 0.0, %v742
        %v744 = vpop.f32.mrf.mxu0
        %745 = vdwg.mxu0
        %754 = vrot.lane.b32.xlu0 %v483, 112
        %v755 = vpop.permute.xlu0 %754
        %756 = vrot.lane.b32.xlu0 %v488, 112
        %v757 = vpop.permute.xlu0 %756
        %758 = vrot.lane.b32.xlu0 %v568, 112
        %v759 = vpop.permute.xlu0 %758
        %760 = vrot.lane.b32.xlu0 %v573, 112
        %v761 = vpop.permute.xlu0 %760
        %762 = vrot.lane.b32.xlu0 %v653, 112
        %v763 = vpop.permute.xlu0 %762
        %764 = vrot.lane.b32.xlu0 %v658, 112
        %v765 = vpop.permute.xlu0 %764
        %766 = vrot.lane.b32.xlu0 %v738, 112
        %v767 = vpop.permute.xlu0 %766
        %768 = vrot.lane.b32.xlu0 %v743, 112
        %v769 = vpop.permute.xlu0 %768
        %v778 = vadd.f32 %v473, %v755
        %v779 = vadd.f32 %v478, %v757
        %v780 = vadd.f32 %v558, %v759
        %v781 = vadd.f32 %v563, %v761
        %v782 = vadd.f32 %v643, %v763
        %v783 = vadd.f32 %v648, %v765
        %v784 = vadd.f32 %v728, %v767
        %v785 = vadd.f32 %v733, %v769
        %786 = vrot.lane.b32.xlu0 %v483, 16
        %v787 = vpop.permute.xlu0 %786
        %788 = vrot.lane.b32.xlu0 %v488, 16
        %v789 = vpop.permute.xlu0 %788
        %790 = vrot.lane.b32.xlu0 %v568, 16
        %v791 = vpop.permute.xlu0 %790
        %792 = vrot.lane.b32.xlu0 %v573, 16
        %v793 = vpop.permute.xlu0 %792
        %794 = vrot.lane.b32.xlu0 %v653, 16
        %v795 = vpop.permute.xlu0 %794
        %796 = vrot.lane.b32.xlu0 %v658, 16
        %v797 = vpop.permute.xlu0 %796
        %798 = vrot.lane.b32.xlu0 %v738, 16
        %v799 = vpop.permute.xlu0 %798
        %800 = vrot.lane.b32.xlu0 %v743, 16
        %v801 = vpop.permute.xlu0 %800
        %v810 = vsub.f32 %v473, %v787
        %v811 = vsub.f32 %v478, %v789
        %v812 = vsub.f32 %v558, %v791
        %v813 = vsub.f32 %v563, %v793
        %v814 = vsub.f32 %v643, %v795
        %v815 = vsub.f32 %v648, %v797
        %v816 = vsub.f32 %v728, %v799
        %v817 = vsub.f32 %v733, %v801
        %v818 = vld [vmem:[%s3] sm:$0xff]
        %v819 = vld [vmem:[%s3 + $0x8] sm:$0xff]
        %v820 = vld [vmem:[%s3 + $0x10] sm:$0xff]
        %v821 = vld [vmem:[%s3 + $0x18] sm:$0xff]
        %v822 = vld [vmem:[%s3 + $0x20] sm:$0xff]
        %v823 = vld [vmem:[%s3 + $0x28] sm:$0xff]
        %v824 = vld [vmem:[%s3 + $0x30] sm:$0xff]
        %v825 = vld [vmem:[%s3 + $0x38] sm:$0xff]
        %v826 = vld [vmem:[%s4] sm:$0xff]
        %v827 = vld [vmem:[%s4 + $0x8] sm:$0xff]
        %v828 = vld [vmem:[%s4 + $0x10] sm:$0xff]
        %v829 = vld [vmem:[%s4 + $0x18] sm:$0xff]
        %v830 = vld [vmem:[%s4 + $0x20] sm:$0xff]
        %v831 = vld [vmem:[%s4 + $0x28] sm:$0xff]
        %v832 = vld [vmem:[%s4 + $0x30] sm:$0xff]
        %v833 = vld [vmem:[%s4 + $0x38] sm:$0xff]
        %v834 = vmul.f32 %v778, %v818
        %v835 = vmul.f32 %v779, %v819
        %v836 = vmul.f32 %v780, %v820
        %v837 = vmul.f32 %v781, %v821
        %v838 = vmul.f32 %v782, %v822
        %v839 = vmul.f32 %v783, %v823
        %v840 = vmul.f32 %v784, %v824
        %v841 = vmul.f32 %v785, %v825
        %850 = vrot.lane.b32.xlu0 %v826, 16
        %v851 = vpop.permute.xlu0 %850
        %852 = vrot.lane.b32.xlu0 %v827, 16
        %v853 = vpop.permute.xlu0 %852
        %854 = vrot.lane.b32.xlu0 %v828, 16
        %v855 = vpop.permute.xlu0 %854
        %856 = vrot.lane.b32.xlu0 %v829, 16
        %v857 = vpop.permute.xlu0 %856
        %858 = vrot.lane.b32.xlu0 %v830, 16
        %v859 = vpop.permute.xlu0 %858
        %860 = vrot.lane.b32.xlu0 %v831, 16
        %v861 = vpop.permute.xlu0 %860
        %862 = vrot.lane.b32.xlu0 %v832, 16
        %v863 = vpop.permute.xlu0 %862
        %864 = vrot.lane.b32.xlu0 %v833, 16
        %v865 = vpop.permute.xlu0 %864
        %v874 = vmul.f32 %v810, %v851
        %v875 = vmul.f32 %v811, %v853
        %v876 = vmul.f32 %v812, %v855
        %v877 = vmul.f32 %v813, %v857
        %v878 = vmul.f32 %v814, %v859
        %v879 = vmul.f32 %v815, %v861
        %v880 = vmul.f32 %v816, %v863
        %v881 = vmul.f32 %v817, %v865
        %890 = vrot.lane.b32.xlu0 %v874, 112
        %v891 = vpop.permute.xlu0 %890
        %892 = vrot.lane.b32.xlu0 %v875, 112
        %v893 = vpop.permute.xlu0 %892
        %894 = vrot.lane.b32.xlu0 %v876, 112
        %v895 = vpop.permute.xlu0 %894
        %896 = vrot.lane.b32.xlu0 %v877, 112
        %v897 = vpop.permute.xlu0 %896
        %898 = vrot.lane.b32.xlu0 %v878, 112
        %v899 = vpop.permute.xlu0 %898
        %900 = vrot.lane.b32.xlu0 %v879, 112
        %v901 = vpop.permute.xlu0 %900
        %902 = vrot.lane.b32.xlu0 %v880, 112
        %v903 = vpop.permute.xlu0 %902
        %904 = vrot.lane.b32.xlu0 %v881, 112
        %v905 = vpop.permute.xlu0 %904
        %v914 = vsub.f32 %v834, %v891
        %v915 = vsub.f32 %v835, %v893
        %v916 = vsub.f32 %v836, %v895
        %v917 = vsub.f32 %v837, %v897
        %v918 = vsub.f32 %v838, %v899
        %v919 = vsub.f32 %v839, %v901
        %v920 = vsub.f32 %v840, %v903
        %v921 = vsub.f32 %v841, %v905
        %v922 = vmul.f32 %v778, %v826
        %v923 = vmul.f32 %v779, %v827
        %v924 = vmul.f32 %v780, %v828
        %v925 = vmul.f32 %v781, %v829
        %v926 = vmul.f32 %v782, %v830
        %v927 = vmul.f32 %v783, %v831
        %v928 = vmul.f32 %v784, %v832
        %v929 = vmul.f32 %v785, %v833
        %938 = vrot.lane.b32.xlu0 %v818, 16
        %v939 = vpop.permute.xlu0 %938
        %940 = vrot.lane.b32.xlu0 %v819, 16
        %v941 = vpop.permute.xlu0 %940
        %942 = vrot.lane.b32.xlu0 %v820, 16
        %v943 = vpop.permute.xlu0 %942
        %944 = vrot.lane.b32.xlu0 %v821, 16
        %v945 = vpop.permute.xlu0 %944
        %946 = vrot.lane.b32.xlu0 %v822, 16
        %v947 = vpop.permute.xlu0 %946
        %948 = vrot.lane.b32.xlu0 %v823, 16
        %v949 = vpop.permute.xlu0 %948
        %950 = vrot.lane.b32.xlu0 %v824, 16
        %v951 = vpop.permute.xlu0 %950
        %952 = vrot.lane.b32.xlu0 %v825, 16
        %v953 = vpop.permute.xlu0 %952
        %v962 = vmul.f32 %v810, %v939
        %v963 = vmul.f32 %v811, %v941
        %v964 = vmul.f32 %v812, %v943
        %v965 = vmul.f32 %v813, %v945
        %v966 = vmul.f32 %v814, %v947
        %v967 = vmul.f32 %v815, %v949
        %v968 = vmul.f32 %v816, %v951
        %v969 = vmul.f32 %v817, %v953
        %978 = vrot.lane.b32.xlu0 %v962, 112
        %v979 = vpop.permute.xlu0 %978
        %980 = vrot.lane.b32.xlu0 %v963, 112
        %v981 = vpop.permute.xlu0 %980
        %982 = vrot.lane.b32.xlu0 %v964, 112
        %v983 = vpop.permute.xlu0 %982
        %984 = vrot.lane.b32.xlu0 %v965, 112
        %v985 = vpop.permute.xlu0 %984
        %986 = vrot.lane.b32.xlu0 %v966, 112
        %v987 = vpop.permute.xlu0 %986
        %988 = vrot.lane.b32.xlu0 %v967, 112
        %v989 = vpop.permute.xlu0 %988
        %990 = vrot.lane.b32.xlu0 %v968, 112
        %v991 = vpop.permute.xlu0 %990
        %992 = vrot.lane.b32.xlu0 %v969, 112
        %v993 = vpop.permute.xlu0 %992
        %v1002 = vadd.f32 %v922, %v979
        %v1003 = vadd.f32 %v923, %v981
        %v1004 = vadd.f32 %v924, %v983
        %v1005 = vadd.f32 %v925, %v985
        %v1006 = vadd.f32 %v926, %v987
        %v1007 = vadd.f32 %v927, %v989
        %v1008 = vadd.f32 %v928, %v991
        %v1009 = vadd.f32 %v929, %v993
        %1018 = vrot.lane.b32.xlu0 %v1002, 16
        %v1019 = vpop.permute.xlu0 %1018
        %1020 = vrot.lane.b32.xlu0 %v1003, 16
        %v1021 = vpop.permute.xlu0 %1020
        %1022 = vrot.lane.b32.xlu0 %v1004, 16
        %v1023 = vpop.permute.xlu0 %1022
        %1024 = vrot.lane.b32.xlu0 %v1005, 16
        %v1025 = vpop.permute.xlu0 %1024
        %1026 = vrot.lane.b32.xlu0 %v1006, 16
        %v1027 = vpop.permute.xlu0 %1026
        %1028 = vrot.lane.b32.xlu0 %v1007, 16
        %v1029 = vpop.permute.xlu0 %1028
        %1030 = vrot.lane.b32.xlu0 %v1008, 16
        %v1031 = vpop.permute.xlu0 %1030
        %1032 = vrot.lane.b32.xlu0 %v1009, 16
        %v1033 = vpop.permute.xlu0 %1032
        %v1042 = vsel %vm260, %v914, %v1019
        %v1043 = vsel %vm260, %v915, %v1021
        %v1044 = vsel %vm260, %v916, %v1023
        %v1045 = vsel %vm260, %v917, %v1025
        %v1046 = vsel %vm260, %v918, %v1027
        %v1047 = vsel %vm260, %v919, %v1029
        %v1048 = vsel %vm260, %v920, %v1031
        %v1049 = vsel %vm260, %v921, %v1033
        %1050 = vmatprep.subr.mxu0 0.0
        %1051 = vmatpush1.msra.mxu0 0.0
        %1052 = vmatprep.subr.mxu0 0.0
        %1053 = vmatpush1.msra.mxu0 0.0
        %1054 = vmatprep.subr.mxu0 0.0
        %1055 = vmatpush1.msra.mxu0 0.0
        %1056 = vmatprep.subr.mxu0 0.0
        %1057 = vmatpush1.msra.mxu0 0.0
        %1058 = vmatprep.subr.mxu0 0.0
        %1059 = vmatpush1.msra.mxu0 0.0
        %1060 = vmatprep.subr.mxu0 0.0
        %1061 = vmatpush1.msra.mxu0 0.0
        %1062 = vmatprep.subr.mxu0 0.0
        %1063 = vmatpush1.msra.mxu0 0.0
        %1064 = vmatprep.subr.mxu0 0.0
        %1065 = vmatpush1.msra.mxu0 0.0
        %1066 = vmatprep.subr.mxu0 0.0
        %1067 = vmatpush1.msra.mxu0 0.0
        %1068 = vmatprep.subr.mxu0 0.0
        %1069 = vmatpush1.msra.mxu0 0.0
        %1070 = vmatprep.subr.mxu0 0.0
        %1071 = vmatpush1.msra.mxu0 0.0
        %1072 = vmatprep.subr.mxu0 0.0
        %1073 = vmatpush1.msra.mxu0 0.0
        %1074 = vmatprep.subr.mxu0 0.0
        %1075 = vmatpush1.msra.mxu0 0.0
        %1076 = vmatprep.subr.mxu0 0.0
        %1077 = vmatpush1.msra.mxu0 0.0
        %1078 = vmatprep.subr.mxu0 0.0
        %1079 = vmatpush1.msra.mxu0 %v1043
        %1080 = vmatprep.subr.mxu0 0.0
        %1081 = vmatpush1.msra.mxu0 %v1042
        %1082 = vmatprep.subr.mxu0 0.0
        %1083 = vmatpush2.msra.mxu0 0.0
        %1084 = vmatprep.subr.mxu0 0.0
        %1085 = vmatpush2.msra.mxu0 0.0
        %1086 = vmatprep.subr.mxu0 0.0
        %1087 = vmatpush2.msra.mxu0 0.0
        %1088 = vmatprep.subr.mxu0 0.0
        %1089 = vmatpush2.msra.mxu0 0.0
        %1090 = vmatprep.subr.mxu0 0.0
        %1091 = vmatpush2.msra.mxu0 0.0
        %1092 = vmatprep.subr.mxu0 0.0
        %1093 = vmatpush2.msra.mxu0 0.0
        %1094 = vmatprep.subr.mxu0 0.0
        %1095 = vmatpush2.msra.mxu0 0.0
        %1096 = vmatprep.subr.mxu0 0.0
        %1097 = vmatpush2.msra.mxu0 0.0
        %1098 = vmatprep.subr.mxu0 0.0
        %1099 = vmatpush2.msra.mxu0 0.0
        %1100 = vmatprep.subr.mxu0 0.0
        %1101 = vmatpush2.msra.mxu0 0.0
        %1102 = vmatprep.subr.mxu0 0.0
        %1103 = vmatpush2.msra.mxu0 0.0
        %1104 = vmatprep.subr.mxu0 0.0
        %1105 = vmatpush2.msra.mxu0 0.0
        %1106 = vmatprep.subr.mxu0 0.0
        %1107 = vmatpush2.msra.mxu0 0.0
        %1108 = vmatprep.subr.mxu0 0.0
        %1109 = vmatpush2.msra.mxu0 0.0
        %1110 = vmatprep.subr.mxu0 0.0
        %1111 = vmatpush2.msra.mxu0 0.0
        %1112 = vmatprep.subr.mxu0 0.0
        %1113 = vmatpush2.msra.mxu0 0.0
        %1114 = vmatprep.mubr.f32.mxu0 0.0
        %1115 = vmatmul.mubr.f32.gmra.mxu0 %v395
        %v1116 = vpop.f32.mrf.mxu0
        %v1117 = vadd.f32 0.0, %v1116
        %v1118 = vpop.f32.mrf.mxu0
        %1119 = vmatprep.mubr.f32.mxu0 0.0
        %1120 = vmatmul.mubr.f32.gmra.mxu0 %v398
        %v1121 = vpop.f32.mrf.mxu0
        %v1122 = vadd.f32 0.0, %v1121
        %v1123 = vpop.f32.mrf.mxu0
        %1124 = vmatprep.mubr.f32.mxu0 0.0
        %1125 = vmatmul.mubr.f32.gmra.mxu0 %v401
        %v1126 = vpop.f32.mrf.mxu0
        %v1127 = vadd.f32 0.0, %v1126
        %v1128 = vpop.f32.mrf.mxu0
        %1129 = vmatprep.mubr.f32.mxu0 0.0
        %1130 = vmatmul.mubr.f32.gmra.mxu0 %v404
        %v1131 = vpop.f32.mrf.mxu0
        %v1132 = vadd.f32 0.0, %v1131
        %v1133 = vpop.f32.mrf.mxu0
        %1134 = vdwg.mxu0
        %1135 = vmatprep.subr.mxu0 0.0
        %1136 = vmatpush1.msra.mxu0 0.0
        %1137 = vmatprep.subr.mxu0 0.0
        %1138 = vmatpush1.msra.mxu0 0.0
        %1139 = vmatprep.subr.mxu0 0.0
        %1140 = vmatpush1.msra.mxu0 0.0
        %1141 = vmatprep.subr.mxu0 0.0
        %1142 = vmatpush1.msra.mxu0 0.0
        %1143 = vmatprep.subr.mxu0 0.0
        %1144 = vmatpush1.msra.mxu0 0.0
        %1145 = vmatprep.subr.mxu0 0.0
        %1146 = vmatpush1.msra.mxu0 0.0
        %1147 = vmatprep.subr.mxu0 0.0
        %1148 = vmatpush1.msra.mxu0 0.0
        %1149 = vmatprep.subr.mxu0 0.0
        %1150 = vmatpush1.msra.mxu0 0.0
        %1151 = vmatprep.subr.mxu0 0.0
        %1152 = vmatpush1.msra.mxu0 0.0
        %1153 = vmatprep.subr.mxu0 0.0
        %1154 = vmatpush1.msra.mxu0 0.0
        %1155 = vmatprep.subr.mxu0 0.0
        %1156 = vmatpush1.msra.mxu0 0.0
        %1157 = vmatprep.subr.mxu0 0.0
        %1158 = vmatpush1.msra.mxu0 0.0
        %1159 = vmatprep.subr.mxu0 0.0
        %1160 = vmatpush1.msra.mxu0 0.0
        %1161 = vmatprep.subr.mxu0 0.0
        %1162 = vmatpush1.msra.mxu0 0.0
        %1163 = vmatprep.subr.mxu0 0.0
        %1164 = vmatpush1.msra.mxu0 %v1045
        %1165 = vmatprep.subr.mxu0 0.0
        %1166 = vmatpush1.msra.mxu0 %v1044
        %1167 = vmatprep.subr.mxu0 0.0
        %1168 = vmatpush2.msra.mxu0 0.0
        %1169 = vmatprep.subr.mxu0 0.0
        %1170 = vmatpush2.msra.mxu0 0.0
        %1171 = vmatprep.subr.mxu0 0.0
        %1172 = vmatpush2.msra.mxu0 0.0
        %1173 = vmatprep.subr.mxu0 0.0
        %1174 = vmatpush2.msra.mxu0 0.0
        %1175 = vmatprep.subr.mxu0 0.0
        %1176 = vmatpush2.msra.mxu0 0.0
        %1177 = vmatprep.subr.mxu0 0.0
        %1178 = vmatpush2.msra.mxu0 0.0
        %1179 = vmatprep.subr.mxu0 0.0
        %1180 = vmatpush2.msra.mxu0 0.0
        %1181 = vmatprep.subr.mxu0 0.0
        %1182 = vmatpush2.msra.mxu0 0.0
        %1183 = vmatprep.subr.mxu0 0.0
        %1184 = vmatpush2.msra.mxu0 0.0
        %1185 = vmatprep.subr.mxu0 0.0
        %1186 = vmatpush2.msra.mxu0 0.0
        %1187 = vmatprep.subr.mxu0 0.0
        %1188 = vmatpush2.msra.mxu0 0.0
        %1189 = vmatprep.subr.mxu0 0.0
        %1190 = vmatpush2.msra.mxu0 0.0
        %1191 = vmatprep.subr.mxu0 0.0
        %1192 = vmatpush2.msra.mxu0 0.0
        %1193 = vmatprep.subr.mxu0 0.0
        %1194 = vmatpush2.msra.mxu0 0.0
        %1195 = vmatprep.subr.mxu0 0.0
        %1196 = vmatpush2.msra.mxu0 0.0
        %1197 = vmatprep.subr.mxu0 0.0
        %1198 = vmatpush2.msra.mxu0 0.0
        %1199 = vmatprep.mubr.f32.mxu0 0.0
        %1200 = vmatmul.mubr.f32.gmra.mxu0 %v395
        %v1201 = vpop.f32.mrf.mxu0
        %v1202 = vadd.f32 0.0, %v1201
        %v1203 = vpop.f32.mrf.mxu0
        %1204 = vmatprep.mubr.f32.mxu0 0.0
        %1205 = vmatmul.mubr.f32.gmra.mxu0 %v398
        %v1206 = vpop.f32.mrf.mxu0
        %v1207 = vadd.f32 0.0, %v1206
        %v1208 = vpop.f32.mrf.mxu0
        %1209 = vmatprep.mubr.f32.mxu0 0.0
        %1210 = vmatmul.mubr.f32.gmra.mxu0 %v401
        %v1211 = vpop.f32.mrf.mxu0
        %v1212 = vadd.f32 0.0, %v1211
        %v1213 = vpop.f32.mrf.mxu0
        %1214 = vmatprep.mubr.f32.mxu0 0.0
        %1215 = vmatmul.mubr.f32.gmra.mxu0 %v404
        %v1216 = vpop.f32.mrf.mxu0
        %v1217 = vadd.f32 0.0, %v1216
        %v1218 = vpop.f32.mrf.mxu0
        %1219 = vdwg.mxu0
        %1220 = vmatprep.subr.mxu0 0.0
        %1221 = vmatpush1.msra.mxu0 0.0
        %1222 = vmatprep.subr.mxu0 0.0
        %1223 = vmatpush1.msra.mxu0 0.0
        %1224 = vmatprep.subr.mxu0 0.0
        %1225 = vmatpush1.msra.mxu0 0.0
        %1226 = vmatprep.subr.mxu0 0.0
        %1227 = vmatpush1.msra.mxu0 0.0
        %1228 = vmatprep.subr.mxu0 0.0
        %1229 = vmatpush1.msra.mxu0 0.0
        %1230 = vmatprep.subr.mxu0 0.0
        %1231 = vmatpush1.msra.mxu0 0.0
        %1232 = vmatprep.subr.mxu0 0.0
        %1233 = vmatpush1.msra.mxu0 0.0
        %1234 = vmatprep.subr.mxu0 0.0
        %1235 = vmatpush1.msra.mxu0 0.0
        %1236 = vmatprep.subr.mxu0 0.0
        %1237 = vmatpush1.msra.mxu0 0.0
        %1238 = vmatprep.subr.mxu0 0.0
        %1239 = vmatpush1.msra.mxu0 0.0
        %1240 = vmatprep.subr.mxu0 0.0
        %1241 = vmatpush1.msra.mxu0 0.0
        %1242 = vmatprep.subr.mxu0 0.0
        %1243 = vmatpush1.msra.mxu0 0.0
        %1244 = vmatprep.subr.mxu0 0.0
        %1245 = vmatpush1.msra.mxu0 0.0
        %1246 = vmatprep.subr.mxu0 0.0
        %1247 = vmatpush1.msra.mxu0 0.0
        %1248 = vmatprep.subr.mxu0 0.0
        %1249 = vmatpush1.msra.mxu0 %v1047
        %1250 = vmatprep.subr.mxu0 0.0
        %1251 = vmatpush1.msra.mxu0 %v1046
        %1252 = vmatprep.subr.mxu0 0.0
        %1253 = vmatpush2.msra.mxu0 0.0
        %1254 = vmatprep.subr.mxu0 0.0
        %1255 = vmatpush2.msra.mxu0 0.0
        %1256 = vmatprep.subr.mxu0 0.0
        %1257 = vmatpush2.msra.mxu0 0.0
        %1258 = vmatprep.subr.mxu0 0.0
        %1259 = vmatpush2.msra.mxu0 0.0
        %1260 = vmatprep.subr.mxu0 0.0
        %1261 = vmatpush2.msra.mxu0 0.0
        %1262 = vmatprep.subr.mxu0 0.0
        %1263 = vmatpush2.msra.mxu0 0.0
        %1264 = vmatprep.subr.mxu0 0.0
        %1265 = vmatpush2.msra.mxu0 0.0
        %1266 = vmatprep.subr.mxu0 0.0
        %1267 = vmatpush2.msra.mxu0 0.0
        %1268 = vmatprep.subr.mxu0 0.0
        %1269 = vmatpush2.msra.mxu0 0.0
        %1270 = vmatprep.subr.mxu0 0.0
        %1271 = vmatpush2.msra.mxu0 0.0
        %1272 = vmatprep.subr.mxu0 0.0
        %1273 = vmatpush2.msra.mxu0 0.0
        %1274 = vmatprep.subr.mxu0 0.0
        %1275 = vmatpush2.msra.mxu0 0.0
        %1276 = vmatprep.subr.mxu0 0.0
        %1277 = vmatpush2.msra.mxu0 0.0
        %1278 = vmatprep.subr.mxu0 0.0
        %1279 = vmatpush2.msra.mxu0 0.0
        %1280 = vmatprep.subr.mxu0 0.0
        %1281 = vmatpush2.msra.mxu0 0.0
        %1282 = vmatprep.subr.mxu0 0.0
        %1283 = vmatpush2.msra.mxu0 0.0
        %1284 = vmatprep.mubr.f32.mxu0 0.0
        %1285 = vmatmul.mubr.f32.gmra.mxu0 %v395
        %v1286 = vpop.f32.mrf.mxu0
        %v1287 = vadd.f32 0.0, %v1286
        %v1288 = vpop.f32.mrf.mxu0
        %1289 = vmatprep.mubr.f32.mxu0 0.0
        %1290 = vmatmul.mubr.f32.gmra.mxu0 %v398
        %v1291 = vpop.f32.mrf.mxu0
        %v1292 = vadd.f32 0.0, %v1291
        %v1293 = vpop.f32.mrf.mxu0
        %1294 = vmatprep.mubr.f32.mxu0 0.0
        %1295 = vmatmul.mubr.f32.gmra.mxu0 %v401
        %v1296 = vpop.f32.mrf.mxu0
        %v1297 = vadd.f32 0.0, %v1296
        %v1298 = vpop.f32.mrf.mxu0
        %1299 = vmatprep.mubr.f32.mxu0 0.0
        %1300 = vmatmul.mubr.f32.gmra.mxu0 %v404
        %v1301 = vpop.f32.mrf.mxu0
        %v1302 = vadd.f32 0.0, %v1301
        %v1303 = vpop.f32.mrf.mxu0
        %1304 = vdwg.mxu0
        %1305 = vmatprep.subr.mxu0 0.0
        %1306 = vmatpush1.msra.mxu0 0.0
        %1307 = vmatprep.subr.mxu0 0.0
        %1308 = vmatpush1.msra.mxu0 0.0
        %1309 = vmatprep.subr.mxu0 0.0
        %1310 = vmatpush1.msra.mxu0 0.0
        %1311 = vmatprep.subr.mxu0 0.0
        %1312 = vmatpush1.msra.mxu0 0.0
        %1313 = vmatprep.subr.mxu0 0.0
        %1314 = vmatpush1.msra.mxu0 0.0
        %1315 = vmatprep.subr.mxu0 0.0
        %1316 = vmatpush1.msra.mxu0 0.0
        %1317 = vmatprep.subr.mxu0 0.0
        %1318 = vmatpush1.msra.mxu0 0.0
        %1319 = vmatprep.subr.mxu0 0.0
        %1320 = vmatpush1.msra.mxu0 0.0
        %1321 = vmatprep.subr.mxu0 0.0
        %1322 = vmatpush1.msra.mxu0 0.0
        %1323 = vmatprep.subr.mxu0 0.0
        %1324 = vmatpush1.msra.mxu0 0.0
        %1325 = vmatprep.subr.mxu0 0.0
        %1326 = vmatpush1.msra.mxu0 0.0
        %1327 = vmatprep.subr.mxu0 0.0
        %1328 = vmatpush1.msra.mxu0 0.0
        %1329 = vmatprep.subr.mxu0 0.0
        %1330 = vmatpush1.msra.mxu0 0.0
        %1331 = vmatprep.subr.mxu0 0.0
        %1332 = vmatpush1.msra.mxu0 0.0
        %1333 = vmatprep.subr.mxu0 0.0
        %1334 = vmatpush1.msra.mxu0 %v1049
        %1335 = vmatprep.subr.mxu0 0.0
        %1336 = vmatpush1.msra.mxu0 %v1048
        %1337 = vmatprep.subr.mxu0 0.0
        %1338 = vmatpush2.msra.mxu0 0.0
        %1339 = vmatprep.subr.mxu0 0.0
        %1340 = vmatpush2.msra.mxu0 0.0
        %1341 = vmatprep.subr.mxu0 0.0
        %1342 = vmatpush2.msra.mxu0 0.0
        %1343 = vmatprep.subr.mxu0 0.0
        %1344 = vmatpush2.msra.mxu0 0.0
        %1345 = vmatprep.subr.mxu0 0.0
        %1346 = vmatpush2.msra.mxu0 0.0
        %1347 = vmatprep.subr.mxu0 0.0
        %1348 = vmatpush2.msra.mxu0 0.0
        %1349 = vmatprep.subr.mxu0 0.0
        %1350 = vmatpush2.msra.mxu0 0.0
        %1351 = vmatprep.subr.mxu0 0.0
        %1352 = vmatpush2.msra.mxu0 0.0
        %1353 = vmatprep.subr.mxu0 0.0
        %1354 = vmatpush2.msra.mxu0 0.0
        %1355 = vmatprep.subr.mxu0 0.0
        %1356 = vmatpush2.msra.mxu0 0.0
        %1357 = vmatprep.subr.mxu0 0.0
        %1358 = vmatpush2.msra.mxu0 0.0
        %1359 = vmatprep.subr.mxu0 0.0
        %1360 = vmatpush2.msra.mxu0 0.0
        %1361 = vmatprep.subr.mxu0 0.0
        %1362 = vmatpush2.msra.mxu0 0.0
        %1363 = vmatprep.subr.mxu0 0.0
        %1364 = vmatpush2.msra.mxu0 0.0
        %1365 = vmatprep.subr.mxu0 0.0
        %1366 = vmatpush2.msra.mxu0 0.0
        %1367 = vmatprep.subr.mxu0 0.0
        %1368 = vmatpush2.msra.mxu0 0.0
        %1369 = vmatprep.mubr.f32.mxu0 0.0
        %1370 = vmatmul.mubr.f32.gmra.mxu0 %v395
        %v1371 = vpop.f32.mrf.mxu0
        %v1372 = vadd.f32 0.0, %v1371
        %v1373 = vpop.f32.mrf.mxu0
        %1374 = vmatprep.mubr.f32.mxu0 0.0
        %1375 = vmatmul.mubr.f32.gmra.mxu0 %v398
        %v1376 = vpop.f32.mrf.mxu0
        %v1377 = vadd.f32 0.0, %v1376
        %v1378 = vpop.f32.mrf.mxu0
        %1379 = vmatprep.mubr.f32.mxu0 0.0
        %1380 = vmatmul.mubr.f32.gmra.mxu0 %v401
        %v1381 = vpop.f32.mrf.mxu0
        %v1382 = vadd.f32 0.0, %v1381
        %v1383 = vpop.f32.mrf.mxu0
        %1384 = vmatprep.mubr.f32.mxu0 0.0
        %1385 = vmatmul.mubr.f32.gmra.mxu0 %v404
        %v1386 = vpop.f32.mrf.mxu0
        %v1387 = vadd.f32 0.0, %v1386
        %v1388 = vpop.f32.mrf.mxu0
        %1389 = vdwg.mxu0
        %1398 = vrot.lane.b32.xlu0 %v1127, 112
        %v1399 = vpop.permute.xlu0 %1398
        %1400 = vrot.lane.b32.xlu0 %v1132, 112
        %v1401 = vpop.permute.xlu0 %1400
        %1402 = vrot.lane.b32.xlu0 %v1212, 112
        %v1403 = vpop.permute.xlu0 %1402
        %1404 = vrot.lane.b32.xlu0 %v1217, 112
        %v1405 = vpop.permute.xlu0 %1404
        %1406 = vrot.lane.b32.xlu0 %v1297, 112
        %v1407 = vpop.permute.xlu0 %1406
        %1408 = vrot.lane.b32.xlu0 %v1302, 112
        %v1409 = vpop.permute.xlu0 %1408
        %1410 = vrot.lane.b32.xlu0 %v1382, 112
        %v1411 = vpop.permute.xlu0 %1410
        %1412 = vrot.lane.b32.xlu0 %v1387, 112
        %v1413 = vpop.permute.xlu0 %1412
        %v1422 = vsub.f32 %v1117, %v1399
        %v1423 = vsub.f32 %v1122, %v1401
        %v1424 = vsub.f32 %v1202, %v1403
        %v1425 = vsub.f32 %v1207, %v1405
        %v1426 = vsub.f32 %v1287, %v1407
        %v1427 = vsub.f32 %v1292, %v1409
        %v1428 = vsub.f32 %v1372, %v1411
        %v1429 = vsub.f32 %v1377, %v1413
        %1430 = vrot.lane.b32.xlu0 %v1127, 16
        %v1431 = vpop.permute.xlu0 %1430
        %1432 = vrot.lane.b32.xlu0 %v1132, 16
        %v1433 = vpop.permute.xlu0 %1432
        %1434 = vrot.lane.b32.xlu0 %v1212, 16
        %v1435 = vpop.permute.xlu0 %1434
        %1436 = vrot.lane.b32.xlu0 %v1217, 16
        %v1437 = vpop.permute.xlu0 %1436
        %1438 = vrot.lane.b32.xlu0 %v1297, 16
        %v1439 = vpop.permute.xlu0 %1438
        %1440 = vrot.lane.b32.xlu0 %v1302, 16
        %v1441 = vpop.permute.xlu0 %1440
        %1442 = vrot.lane.b32.xlu0 %v1382, 16
        %v1443 = vpop.permute.xlu0 %1442
        %1444 = vrot.lane.b32.xlu0 %v1387, 16
        %v1445 = vpop.permute.xlu0 %1444
        %v1454 = vadd.f32 %v1117, %v1431
        %v1455 = vadd.f32 %v1122, %v1433
        %v1456 = vadd.f32 %v1202, %v1435
        %v1457 = vadd.f32 %v1207, %v1437
        %v1458 = vadd.f32 %v1287, %v1439
        %v1459 = vadd.f32 %v1292, %v1441
        %v1460 = vadd.f32 %v1372, %v1443
        %v1461 = vadd.f32 %v1377, %v1445
        %v1462 = vsel %vm260, %v1422, %v1454
        %v1463 = vsel %vm260, %v1423, %v1455
        %v1464 = vsel %vm260, %v1424, %v1456
        %v1465 = vsel %vm260, %v1425, %v1457
        %v1466 = vsel %vm260, %v1426, %v1458
        %v1467 = vsel %vm260, %v1427, %v1459
        %v1468 = vsel %vm260, %v1428, %v1460
        %v1469 = vsel %vm260, %v1429, %v1461
        %v1470 = vld [vmem:[%s5] sm:$0xff]
        %v1471 = vld [vmem:[%s5 + $0x8] sm:$0xff]
        %v1472 = vld [vmem:[%s5 + $0x10] sm:$0xff]
        %v1473 = vld [vmem:[%s5 + $0x18] sm:$0xff]
        %vm1474 = vcmask 261120
        %v1476 = vsel %vm1474, %v1462, 0
        %v1479 = vsel %vm1474, %v1463, 0
        %v1482 = vsel %vm1474, %v1464, 0
        %v1485 = vsel %vm1474, %v1465, 0
        %v1488 = vsel %vm1474, %v1466, 0
        %v1491 = vsel %vm1474, %v1467, 0
        %v1494 = vsel %vm1474, %v1468, 0
        %v1497 = vsel %vm1474, %v1469, 0
        %1499 = vmatprep.subr.mxu0 0.0
        %1500 = vmatpush1.msra.mxu0 0.0
        %1501 = vmatprep.subr.mxu0 0.0
        %1502 = vmatpush1.msra.mxu0 0.0
        %1503 = vmatprep.subr.mxu0 0.0
        %1504 = vmatpush1.msra.mxu0 0.0
        %1505 = vmatprep.subr.mxu0 0.0
        %1506 = vmatpush1.msra.mxu0 0.0
        %1507 = vmatprep.subr.mxu0 0.0
        %1508 = vmatpush1.msra.mxu0 0.0
        %1509 = vmatprep.subr.mxu0 0.0
        %1510 = vmatpush1.msra.mxu0 0.0
        %1511 = vmatprep.subr.mxu0 0.0
        %1512 = vmatpush1.msra.mxu0 0.0
        %1513 = vmatprep.subr.mxu0 0.0
        %1514 = vmatpush1.msra.mxu0 0.0
        %1515 = vmatprep.subr.mxu0 0.0
        %1516 = vmatpush1.msra.mxu0 0.0
        %1517 = vmatprep.subr.mxu0 0.0
        %1518 = vmatpush1.msra.mxu0 0.0
        %1519 = vmatprep.subr.mxu0 0.0
        %1520 = vmatpush1.msra.mxu0 0.0
        %1521 = vmatprep.subr.mxu0 0.0
        %1522 = vmatpush1.msra.mxu0 0.0
        %1523 = vmatprep.subr.mxu0 0.0
        %1524 = vmatpush1.msra.mxu0 %v1473
        %1525 = vmatprep.subr.mxu0 0.0
        %1526 = vmatpush1.msra.mxu0 %v1472
        %1527 = vmatprep.subr.mxu0 0.0
        %1528 = vmatpush1.msra.mxu0 %v1471
        %1529 = vmatprep.subr.mxu0 0.0
        %1530 = vmatpush1.msra.mxu0 %v1470
        %1531 = vmatprep.subr.mxu0 0.0
        %1532 = vmatpush2.msra.mxu0 0.0
        %1533 = vmatprep.subr.mxu0 0.0
        %1534 = vmatpush2.msra.mxu0 0.0
        %1535 = vmatprep.subr.mxu0 0.0
        %1536 = vmatpush2.msra.mxu0 0.0
        %1537 = vmatprep.subr.mxu0 0.0
        %1538 = vmatpush2.msra.mxu0 0.0
        %1539 = vmatprep.subr.mxu0 0.0
        %1540 = vmatpush2.msra.mxu0 0.0
        %1541 = vmatprep.subr.mxu0 0.0
        %1542 = vmatpush2.msra.mxu0 0.0
        %1543 = vmatprep.subr.mxu0 0.0
        %1544 = vmatpush2.msra.mxu0 0.0
        %1545 = vmatprep.subr.mxu0 0.0
        %1546 = vmatpush2.msra.mxu0 0.0
        %1547 = vmatprep.subr.mxu0 0.0
        %1548 = vmatpush2.msra.mxu0 0.0
        %1549 = vmatprep.subr.mxu0 0.0
        %1550 = vmatpush2.msra.mxu0 0.0
        %1551 = vmatprep.subr.mxu0 0.0
        %1552 = vmatpush2.msra.mxu0 0.0
        %1553 = vmatprep.subr.mxu0 0.0
        %1554 = vmatpush2.msra.mxu0 0.0
        %1555 = vmatprep.subr.mxu0 0.0
        %1556 = vmatpush2.msra.mxu0 0.0
        %1557 = vmatprep.subr.mxu0 0.0
        %1558 = vmatpush2.msra.mxu0 0.0
        %1559 = vmatprep.subr.mxu0 0.0
        %1560 = vmatpush2.msra.mxu0 0.0
        %1561 = vmatprep.subr.mxu0 0.0
        %1562 = vmatpush2.msra.mxu0 0.0
        %1563 = vmatprep.mubr.f32.mxu0 0.0
        %1564 = vmatmul.mubr.f32.gmra.mxu0 %v1476
        %v1565 = vpop.f32.mrf.mxu0
        %v1566 = vadd.f32 0.0, %v1565
        %v1567 = vpop.f32.mrf.mxu0
        %1568 = vmatprep.mubr.f32.mxu0 0.0
        %1569 = vmatmul.mubr.f32.gmra.mxu0 %v1479
        %v1570 = vpop.f32.mrf.mxu0
        %v1571 = vadd.f32 0.0, %v1570
        %v1572 = vpop.f32.mrf.mxu0
        %1573 = vmatprep.mubr.f32.mxu0 0.0
        %1574 = vmatmul.mubr.f32.gmra.mxu0 %v1482
        %v1575 = vpop.f32.mrf.mxu0
        %v1576 = vadd.f32 0.0, %v1575
        %v1577 = vpop.f32.mrf.mxu0
        %1578 = vmatprep.mubr.f32.mxu0 0.0
        %1579 = vmatmul.mubr.f32.gmra.mxu0 %v1485
        %v1580 = vpop.f32.mrf.mxu0
        %v1581 = vadd.f32 0.0, %v1580
        %v1582 = vpop.f32.mrf.mxu0
        %1583 = vmatprep.mubr.f32.mxu0 0.0
        %1584 = vmatmul.mubr.f32.gmra.mxu0 %v1488
        %v1585 = vpop.f32.mrf.mxu0
        %v1586 = vadd.f32 0.0, %v1585
        %v1587 = vpop.f32.mrf.mxu0
        %1588 = vmatprep.mubr.f32.mxu0 0.0
        %1589 = vmatmul.mubr.f32.gmra.mxu0 %v1491
        %v1590 = vpop.f32.mrf.mxu0
        %v1591 = vadd.f32 0.0, %v1590
        %v1592 = vpop.f32.mrf.mxu0
        %1593 = vmatprep.mubr.f32.mxu0 0.0
        %1594 = vmatmul.mubr.f32.gmra.mxu0 %v1494
        %v1595 = vpop.f32.mrf.mxu0
        %v1596 = vadd.f32 0.0, %v1595
        %v1597 = vpop.f32.mrf.mxu0
        %1598 = vmatprep.mubr.f32.mxu0 0.0
        %1599 = vmatmul.mubr.f32.gmra.mxu0 %v1497
        %v1600 = vpop.f32.mrf.mxu0
        %v1601 = vadd.f32 0.0, %v1600
        %v1602 = vpop.f32.mrf.mxu0
        %1603 = vdwg.mxu0
        %1604 = vst.msk [vmem:[%s244] sm:$0xff] %vm260, %v1566
        %1605 = vst.msk [vmem:[%s244 + $0x8] sm:$0xff] %vm260, %v1571
        %1606 = vst.msk [vmem:[%s244 + $0x10] sm:$0xff] %vm260, %v1576
        %1607 = vst.msk [vmem:[%s244 + $0x18] sm:$0xff] %vm260, %v1581
        %1608 = vst.msk [vmem:[%s244 + $0x20] sm:$0xff] %vm260, %v1586
        %1609 = vst.msk [vmem:[%s244 + $0x28] sm:$0xff] %vm260, %v1591
        %1610 = vst.msk [vmem:[%s244 + $0x30] sm:$0xff] %vm260, %v1596
        %1611 = vst.msk [vmem:[%s244 + $0x38] sm:$0xff] %vm260, %v1601
        %s1612 = sand.u32 %s159, 1
        %s1613 = scalar_lea.sflag [#allocation3], %s1612
        %s1614 = sand.u32 %s159, 1
        %s1615 = smul.addr %s1614, 64
        %s1616 = scalar_lea.vmem [#allocation2], %s1615
        // Predicated region
        $region45: #{spectral_gating_forward.1} parent=43 // pred_check
          %p1617 = pneg %p169
        $region46: #{spectral_gating_forward.1} parent=43 // pred_check_branch
          %1619 = sbr.rel (%p1617) target = $region48
        $region47: #{spectral_gating_forward.1} parent=43 // pred_region
          %s1621 = ssub.s32 1024, 1024
          %1622 = vsyncadd %s1613, %s1621
          %s1623 = smul.addr %s20, 8
          %s1624 = smul.addr %s1623, 128
          %s1625 = scalar_lea.hbm %s6, %s1624
          %s1626 = sshll.u32 %s1616, 4
          %s1627 = int_to_ptr.vmem [resolvable:$true] %s1626
          %1632 = dma.vmem_to_hbm [thread:$0]  %s1627, 1024, %s1625, %s1613, 128, 128, 8
        $region48: #{spectral_gating_forward.1} parent=43 // pred_fallthru
          _
      $region44: #{spectral_gating_forward.1} parent=5 // pred_fallthru
        _
      %p1633 = scmp.le.s32.totalorder 2, %s15
      // Predicated region
      $region49: #{spectral_gating_forward.1} parent=5 // pred_check
        %p1634 = pneg %p1633
      $region50: #{spectral_gating_forward.1} parent=5 // pred_check_branch
        %1636 = sbr.rel (%p1634) target = $region52
      $region51: #{spectral_gating_forward.1} parent=5 // pred_region
        %s1637 = ssub.s32 %s15, 2
        // Predicated region
        $region53: #{spectral_gating_forward.1} parent=51 // pred_check
          %p1638 = pneg %p175
        $region54: #{spectral_gating_forward.1} parent=51 // pred_check_branch
          %1640 = sbr.rel (%p1638) target = $region56
        $region55: #{spectral_gating_forward.1} parent=51 // pred_region
          %s1641 = sand.u32 %s160, 1
          %s1642 = scalar_lea.sflag [#allocation3], %s1641
          %s1643 = sand.u32 %s160, 1
          %s1644 = smul.addr %s1643, 64
          %s1645 = scalar_lea.vmem [#allocation2], %s1644
          %1646 = dma.done %s1642, 1024
        $region56: #{spectral_gating_forward.1} parent=51 // pred_fallthru
          _
      $region52: #{spectral_gating_forward.1} parent=5 // pred_fallthru
        _
    $region6: #{spectral_gating_forward.1} parent=1 // loop_footer
      %s19 = sadd.s32 1, %s15
    $region7: #{spectral_gating_forward.1} parent=1 // loop_footer_branch
      %14 = sbr.rel target = $region3
    $region8: #{spectral_gating_forward.1} parent=1 // loop_exit
      _
    %1647 = vsyncpa [#allocation3], 1
    %s1648 = scalar_lea.sflag [#allocation3], 1
    %1649 = vsyncpa %s1648, 1

</llo_original>
